<compile_context>
chip_gen: v7x
topology: tpu7x:2x2x1
jax: 0.10.0
libtpu: 0.0.40
codegen_flags: <defaults>
</compile_context>

<pallas_src>
import functools

import jax
import jax.numpy as jnp
import numpy as np
from jax import lax
from jax.experimental import pallas as pl
from jax.experimental.pallas import tpu as pltpu

KSIZES = (3, 4, 5)
KMAX = max(KSIZES)
NFILT = 128
BN_EPS = 1e-5


def _round_up(x, m):
    return ((x + m - 1) // m) * m


def textcnn_kernel(tok_ref, emb_ref, wconv_ref, bconv_ref, fc1w_ref, fc1b_ref,
                   fc2w_ref, fc2b_ref, out_ref, *, maxlen, rp, mm_dtype):
    """One batch tile: one-hot embedding lookup + fused im2col conv
    (3 branches, one 2-D matmul) + BN + ReLU + MaxPool + Linear + BN + ReLU +
    Linear.  All reshapes are (8,128)-tile aligned (rp % 8 == 0, lp % 8 == 0)."""
    blp = tok_ref.shape[0]               # bt * Lp
    vocab_p, E = emb_ref.shape
    bt = out_ref.shape[0]
    lp = blp // bt

    # Embedding lookup as a one-hot MXU matmul (exact: selects table rows).
    onehot = (lax.broadcasted_iota(jnp.int32, (blp, vocab_p), 1)
              == tok_ref[...]).astype(mm_dtype)
    x = jnp.dot(onehot, emb_ref[...],
                preferred_element_type=jnp.float32).astype(mm_dtype)
    x = x.reshape(bt, lp, E)              # lp % 8 == 0 -> tile-clean reshape

    # im2col: window row r of sequence b holds [x[b,r], ..., x[b,r+KMAX-1]].
    win = jnp.concatenate(
        [x[:, t:t + rp, :].reshape(bt * rp, E) for t in range(KMAX)], axis=-1)

    # All three Conv1d branches as ONE 2-D matmul: M = bt*rp, K = KMAX*E,
    # N = 3*128.  BN scale is folded into wconv; conv bias + BN shift in bconv.
    y = jnp.dot(win, wconv_ref[...], preferred_element_type=jnp.float32)
    y = jnp.maximum(y + bconv_ref[...], 0.0)     # bias + folded BN + ReLU (f32)
    y = y.reshape(bt, rp, 3 * NFILT)             # rp % 8 == 0 -> tile-clean

    # MaxPool1d(maxlen - 2k + 2): each branch's single pool window is the
    # static row prefix [0, maxlen - 2k + 2); padded rows (>= maxlen-4) never
    # enter any pool window.  Lane slices are at 128-multiples (free).
    feat = jnp.concatenate(
        [jnp.max(y[:, :maxlen - 2 * k + 2, g * NFILT:(g + 1) * NFILT], axis=1)
         for g, k in enumerate(KSIZES)], axis=-1)            # (bt, 384)

    # fc: Linear(384,128) -> BN(128) -> ReLU -> Linear(128, Cp).
    h = jnp.dot(feat.astype(fc1w_ref.dtype), fc1w_ref[...],
                preferred_element_type=jnp.float32)
    h = jnp.maximum(h + fc1b_ref[...], 0.0)
    o = jnp.dot(h.astype(fc2w_ref.dtype), fc2w_ref[...],
                preferred_element_type=jnp.float32) + fc2b_ref[...]
    out_ref[...] = o                              # lane-dense, unmasked store


def _fold_bn(bn):
    scale = bn["gamma"] / jnp.sqrt(bn["var"] + BN_EPS)
    shift = bn["beta"] - bn["mean"] * scale
    return scale, shift


def _pack_params(params, matmul_dtype):
    """Fold eval-mode BN into weights/biases; fuse the 3 conv branches into a
    single (KMAX*E, 384) weight (zero-padded taps) + (1, 384) bias; pad the
    vocabulary and the classifier width to 128-lane multiples."""
    V, E = params["embedding"].shape
    Vp = _round_up(V, 128)
    emb = jnp.pad(params["embedding"], ((0, Vp - V), (0, 0)))  # (Vp, E)

    w_cols, b_cols = [], []
    for k in KSIZES:
        br = params[f"conv{k}"]
        scale, shift = _fold_bn(br["bn"])
        w = br["w"] * scale[None, None, :]                     # (k, E, 128)
        w = jnp.pad(w, ((0, KMAX - k), (0, 0), (0, 0)))        # zero taps >= k
        w_cols.append(w.reshape(-1, NFILT))                    # (KMAX*E, 128)
        b_cols.append(br["b"] * scale + shift)
    wconv = jnp.concatenate(w_cols, axis=1)                    # (KMAX*E, 384)
    bconv = jnp.concatenate(b_cols)[None, :]                   # (1, 384)

    scale, shift = _fold_bn(params["fc_bn"])
    fc1w = params["fc1_w"] * scale[None, :]                    # (384, 128)
    fc1b = (params["fc1_b"] * scale + shift)[None, :]          # (1, 128)

    C = params["fc2_w"].shape[1]
    Cp = _round_up(C, 128)
    fc2w = jnp.pad(params["fc2_w"], ((0, 0), (0, Cp - C)))     # (128, Cp)
    fc2b = jnp.pad(params["fc2_b"], (0, Cp - C))[None, :]      # (1, Cp)

    # Note: folding BN scale before a bf16 cast can lose precision for
    # channels with tiny running variance; keep matmul_dtype=f32 if needed.
    packed = (emb.astype(matmul_dtype),
              wconv.astype(matmul_dtype), bconv.astype(jnp.float32),
              fc1w.astype(matmul_dtype), fc1b.astype(jnp.float32),
              fc2w.astype(matmul_dtype), fc2b.astype(jnp.float32))
    return packed, C, Cp, Vp


def _default_vmem_limit():
    """~3/4 of physical per-core VMEM: ~48 MiB on v7x (64 MiB/TC), ~96 MiB on
    v5e/v6e (128 MiB) -- leaves headroom for compiler scratch/double-buffers."""
    try:
        cap = pltpu.get_tpu_info().vmem_capacity_bytes
    except Exception:   # conservative fallback if the query is unavailable
        cap = 64 * 1024 * 1024
    return int(min(cap * 3 // 4, 112 * 1024 * 1024))


def _auto_block_b(requested, batch, lp, rp, e, cp, vocab_p, vmem_limit,
                  itemsize):
    """Derive the batch tile from the VMEM budget; ensure >=2 tiles when
    possible so v7x's two TensorCores can split the 'parallel' grid axis."""
    lane = 128
    pad = lambda n: _round_up(n, lane)
    # Rough live VMEM bytes per batch row: double-buffered token/output blocks
    # (32-bit), f32 conv activations, and mm_dtype temporaries (one-hot,
    # embedded x, im2col windows).  Weights are O(1) and ignored.
    per_row = 4 * (2 * lp * lane + 2 * cp + rp * pad(3 * NFILT)) \
        + itemsize * (lp * pad(vocab_p) + lp * pad(e) + rp * pad(KMAX * e))
    budget = vmem_limit // 2              # headroom for weights/scratch/spills
    bt = max(8, min(budget // per_row, 512) // 8 * 8)
    if requested is not None:
        bt = max(8, min(bt, _round_up(requested, 8)))
    b8 = _round_up(batch, 8)
    bt = min(bt, b8)
    if b8 >= 16:                          # >= 2 grid tiles (v7x megacore)
        bt = min(bt, max(8, (b8 // 2) // 8 * 8))
    return bt


def textcnn_forward(tokens, params, *, maxlen, block_b=None,
                    matmul_dtype=jnp.float32, vmem_limit_bytes=None):
    """matmul_dtype=jnp.bfloat16 halves matmul-input DMA bytes and feeds the
    MXU at full rate on every generation (v5e included); elementwise math and
    all accumulation stay f32.  block_b=None derives the batch tile from the
    VMEM budget (~3/4 of physical VMEM by default)."""
    for k in KSIZES:
        # MaxPool1d(maxlen - 2k + 2) must yield a length-1 output so that
        # torch.cat(conv_out, 1).squeeze() is (B, 384), as in the module.
        assert maxlen > 3 * k - 3, "maxlen too small for single-window maxpool"

    B, L = tokens.shape
    assert L == maxlen
    V, E = params["embedding"].shape
    # TODO(synk): large vocabularies need an HBM-resident table + DMA row
    # gather (scalar-prefetched tokens) instead of the one-hot MXU lookup.
    assert V <= 4096, "one-hot embedding path assumes a small vocabulary"

    R = maxlen - (KMAX - 1)             # rows needed by the widest pool window
    Rp = _round_up(R, 8)                # 8-aligned conv rows -> clean reshapes
    Lp = _round_up(Rp + KMAX - 1, 8)    # padded sequence length feeding im2col

    (emb, wconv, bconv, fc1w, fc1b, fc2w, fc2b), C, Cp, Vp = _pack_params(
        params, matmul_dtype)

    if vmem_limit_bytes is None:
        vmem_limit_bytes = _default_vmem_limit()
    bt = _auto_block_b(block_b, B, Lp, Rp, E, Cp, Vp, vmem_limit_bytes,
                       jnp.dtype(matmul_dtype).itemsize)
    Bp = _round_up(B, bt)

    # Pad tokens to (Bp, Lp); padded positions feed only conv rows >= R, which
    # never enter any pool window, and padded batch rows are sliced off.
    tok = jnp.pad(tokens.astype(jnp.int32), ((0, Bp - B), (0, Lp - L)))
    tok = tok.reshape(Bp * Lp, 1)

    def const_spec(a):
        return pl.BlockSpec(a.shape, lambda i: (0,) * a.ndim)

    # TODO(synk): for very large maxlen, chunk the conv rows with a running
    # (bt, 384) max accumulator so the (bt, Rp, 384) activations fit v7x VMEM.
    out = pl.pallas_call(
        functools.partial(textcnn_kernel, maxlen=maxlen, rp=Rp,
                          mm_dtype=matmul_dtype),
        out_shape=jax.ShapeDtypeStruct((Bp, Cp), jnp.float32),
        grid=(Bp // bt,),
        in_specs=[pl.BlockSpec((bt * Lp, 1), lambda i: (i, 0)),
                  const_spec(emb),
                  const_spec(wconv), const_spec(bconv),
                  const_spec(fc1w), const_spec(fc1b),
                  const_spec(fc2w), const_spec(fc2b)],
        out_specs=pl.BlockSpec((bt, Cp), lambda i: (i, 0)),
        compiler_params=pltpu.CompilerParams(
            dimension_semantics=("parallel",),
            vmem_limit_bytes=vmem_limit_bytes),
    )(tok, emb, wconv, bconv, fc1w, fc1b, fc2w, fc2b)
    return out[:B, :C]


def reference_forward(tokens, params, *, maxlen):
    """Pure-JAX reference (lax.conv) for correctness checking."""
    emb = params["embedding"][tokens].astype(jnp.float32)
    feats = []
    for k in KSIZES:
        br = params[f"conv{k}"]
        y = jax.lax.conv_general_dilated(
            emb, br["w"], window_strides=(1,), padding="VALID",
            dimension_numbers=("NWC", "WIO", "NWC")) + br["b"]
        bn = br["bn"]
        y = (y - bn["mean"]) / jnp.sqrt(bn["var"] + BN_EPS) * bn["gamma"] + bn["beta"]
        y = jnp.maximum(y, 0.0)
        pool_k = maxlen - 2 * k + 2
        feats.append(jnp.max(y[:, :pool_k, :], axis=1))
    feat = jnp.concatenate(feats, axis=-1)
    h = feat @ params["fc1_w"] + params["fc1_b"]
    bn = params["fc_bn"]
    h = (h - bn["mean"]) / jnp.sqrt(bn["var"] + BN_EPS) * bn["gamma"] + bn["beta"]
    h = jnp.maximum(h, 0.0)
    return h @ params["fc2_w"] + params["fc2_b"]


def init_params(key, *, max_features, embedding_dims, maxlen, nums_class):
    del maxlen
    ks = iter(jax.random.split(key, 40))

    def nrm(shape, scale=0.1):
        return scale * jax.random.normal(next(ks), shape, jnp.float32)

    def bn_params(n):
        return dict(
            gamma=1.0 + nrm((n,)),
            beta=nrm((n,)),
            mean=nrm((n,)),
            var=1.0 + 0.1 * jnp.abs(jax.random.normal(next(ks), (n,), jnp.float32)),
        )

    params = dict(embedding=nrm((max_features, embedding_dims), 1.0))
    for k in KSIZES:
        params[f"conv{k}"] = dict(
            w=nrm((k, embedding_dims, NFILT)),   # (W, I, O) layout
            b=nrm((NFILT,)),
            bn=bn_params(NFILT),
        )
    params["fc1_w"] = nrm((3 * NFILT, NFILT))
    params["fc1_b"] = nrm((NFILT,))
    params["fc_bn"] = bn_params(NFILT)
    params["fc2_w"] = nrm((NFILT, nums_class))
    params["fc2_b"] = nrm((nums_class,))
    return params


if __name__ == "__main__":
    config = dict(max_features=50, embedding_dims=32, maxlen=16, nums_class=5)
    batch = 8

    key = jax.random.PRNGKey(0)
    pkey, tkey = jax.random.split(key)
    params = init_params(pkey, **config)
    tokens = jax.random.randint(
        tkey, (batch, config["maxlen"]), 0, config["max_features"], dtype=jnp.int32)

    ref = reference_forward(tokens, params, maxlen=config["maxlen"])

    # f32 matmul path (tight check).
    out = jax.block_until_ready(
        textcnn_forward(tokens, params, maxlen=config["maxlen"]))
    assert out.shape == (batch, config["nums_class"])
    np.testing.assert_allclose(np.asarray(out), np.asarray(ref),
                               rtol=1e-3, atol=1e-3)

    # bf16 matmul path (full-rate MXU on all generations); loose check.
    out_bf16 = jax.block_until_ready(
        textcnn_forward(tokens, params, maxlen=config["maxlen"],
                        matmul_dtype=jnp.bfloat16))
    np.testing.assert_allclose(np.asarray(out_bf16), np.asarray(ref),
                               rtol=1e-1, atol=1e-1)

    print("KERNEL_OK")
</pallas_src>

<mosaic_0001>
module attributes {stable_mosaic.version = 11 : i64} {
  func.func @textcnn_kernel(%arg0: i32, %arg1: memref<192x1xi32, #tpu.memory_space<vmem>>, %arg2: memref<128x32xf32, #tpu.memory_space<vmem>>, %arg3: memref<160x384xf32, #tpu.memory_space<vmem>>, %arg4: memref<1x384xf32, #tpu.memory_space<vmem>>, %arg5: memref<384x128xf32, #tpu.memory_space<vmem>>, %arg6: memref<1x128xf32, #tpu.memory_space<vmem>>, %arg7: memref<128x128xf32, #tpu.memory_space<vmem>>, %arg8: memref<1x128xf32, #tpu.memory_space<vmem>>, %arg9: memref<8x128xf32, #tpu.memory_space<vmem>>) attributes {dimension_semantics = [#tpu.dimension_semantics<parallel>], iteration_bounds = array<i64: 1>, scalar_prefetch = 0 : i64, scratch_operands = 0 : i64, tpu.core_type = #tpu.core_type<tc>, window_params = [{transform_indices = @transform_0, window_bounds = array<i64: 192, 1>}, {pipeline_mode = #tpu.pipeline_mode<synchronous>, transform_indices = @transform_1, window_bounds = array<i64: 128, 32>}, {pipeline_mode = #tpu.pipeline_mode<synchronous>, transform_indices = @transform_2, window_bounds = array<i64: 160, 384>}, {pipeline_mode = #tpu.pipeline_mode<synchronous>, transform_indices = @transform_3, window_bounds = array<i64: 1, 384>}, {pipeline_mode = #tpu.pipeline_mode<synchronous>, transform_indices = @transform_4, window_bounds = array<i64: 384, 128>}, {pipeline_mode = #tpu.pipeline_mode<synchronous>, transform_indices = @transform_5, window_bounds = array<i64: 1, 128>}, {pipeline_mode = #tpu.pipeline_mode<synchronous>, transform_indices = @transform_6, window_bounds = array<i64: 128, 128>}, {pipeline_mode = #tpu.pipeline_mode<synchronous>, transform_indices = @transform_7, window_bounds = array<i64: 1, 128>}, {transform_indices = @transform_8, window_bounds = array<i64: 8, 128>}]} {
    %0 = tpu.iota {dimensions = array<i32: 1>} : vector<192x128xi32>
    %c0 = arith.constant 0 : index
    %c0_0 = arith.constant 0 : index
    %1 = vector.load %arg1[%c0, %c0_0] : memref<192x1xi32, #tpu.memory_space<vmem>>, vector<192x1xi32>
    %2 = vector.broadcast %1 : vector<192x1xi32> to vector<192x128xi32>
    %3 = arith.cmpi eq, %0, %2 : vector<192x128xi32>
    %4 = arith.extui %3 : vector<192x128xi1> to vector<192x128xi32>
    %5 = arith.sitofp %4 : vector<192x128xi32> to vector<192x128xf32>
    %c0_1 = arith.constant 0 : index
    %c0_2 = arith.constant 0 : index
    %6 = vector.load %arg2[%c0_1, %c0_2] : memref<128x32xf32, #tpu.memory_space<vmem>>, vector<128x32xf32>
    %cst = arith.constant dense<0.000000e+00> : vector<192x32xf32>
    %7 = tpu.matmul %5, %6, %cst {dimension_numbers = #tpu.dot_dimension_numbers<[1], [0], [0], [1], [0, 0, 1, 1], [], []>} : vector<192x128xf32>, vector<128x32xf32>, vector<192x32xf32> -> vector<192x32xf32>
    %8 = vector.shape_cast %7 : vector<192x32xf32> to vector<8x24x32xf32>
    %9 = vector.extract_strided_slice %8 {offsets = [0, 0, 0], sizes = [8, 16, 32], strides = [1, 1, 1]} : vector<8x24x32xf32> to vector<8x16x32xf32>
    %10 = vector.shape_cast %9 : vector<8x16x32xf32> to vector<128x32xf32>
    %11 = vector.extract_strided_slice %8 {offsets = [0, 1, 0], sizes = [8, 16, 32], strides = [1, 1, 1]} : vector<8x24x32xf32> to vector<8x16x32xf32>
    %12 = vector.shape_cast %11 : vector<8x16x32xf32> to vector<128x32xf32>
    %13 = vector.extract_strided_slice %8 {offsets = [0, 2, 0], sizes = [8, 16, 32], strides = [1, 1, 1]} : vector<8x24x32xf32> to vector<8x16x32xf32>
    %14 = vector.shape_cast %13 : vector<8x16x32xf32> to vector<128x32xf32>
    %15 = vector.extract_strided_slice %8 {offsets = [0, 3, 0], sizes = [8, 16, 32], strides = [1, 1, 1]} : vector<8x24x32xf32> to vector<8x16x32xf32>
    %16 = vector.shape_cast %15 : vector<8x16x32xf32> to vector<128x32xf32>
    %17 = vector.extract_strided_slice %8 {offsets = [0, 4, 0], sizes = [8, 16, 32], strides = [1, 1, 1]} : vector<8x24x32xf32> to vector<8x16x32xf32>
    %18 = vector.shape_cast %17 : vector<8x16x32xf32> to vector<128x32xf32>
    %19 = tpu.concatenate %10, %12, %14, %16, %18 in 1 : vector<128x32xf32>, vector<128x32xf32>, vector<128x32xf32>, vector<128x32xf32>, vector<128x32xf32> -> vector<128x160xf32>
    %c0_3 = arith.constant 0 : index
    %c0_4 = arith.constant 0 : index
    %20 = vector.load %arg3[%c0_3, %c0_4] : memref<160x384xf32, #tpu.memory_space<vmem>>, vector<160x384xf32>
    %cst_5 = arith.constant dense<0.000000e+00> : vector<128x384xf32>
    %21 = tpu.matmul %19, %20, %cst_5 {dimension_numbers = #tpu.dot_dimension_numbers<[1], [0], [0], [1], [0, 0, 1, 1], [], []>} : vector<128x160xf32>, vector<160x384xf32>, vector<128x384xf32> -> vector<128x384xf32>
    %c0_6 = arith.constant 0 : index
    %c0_7 = arith.constant 0 : index
    %22 = vector.load %arg4[%c0_6, %c0_7] : memref<1x384xf32, #tpu.memory_space<vmem>>, vector<1x384xf32>
    %23 = vector.broadcast %22 : vector<1x384xf32> to vector<128x384xf32>
    %24 = arith.addf %21, %23 : vector<128x384xf32>
    %cst_8 = arith.constant 0.000000e+00 : f32
    %25 = vector.broadcast %cst_8 : f32 to vector<128x384xf32>
    %26 = arith.maximumf %24, %25 : vector<128x384xf32>
    %27 = vector.shape_cast %26 : vector<128x384xf32> to vector<8x16x384xf32>
    %28 = vector.extract_strided_slice %27 {offsets = [0, 0, 0], sizes = [8, 12, 128], strides = [1, 1, 1]} : vector<8x16x384xf32> to vector<8x12x128xf32>
    %cst_9 = arith.constant dense<0xFF800000> : vector<8x128xf32>
    %29 = vector.multi_reduction <maximumf>, %28, %cst_9 [1] : vector<8x12x128xf32> to vector<8x128xf32>
    %30 = vector.extract_strided_slice %27 {offsets = [0, 0, 128], sizes = [8, 10, 128], strides = [1, 1, 1]} : vector<8x16x384xf32> to vector<8x10x128xf32>
    %cst_10 = arith.constant dense<0xFF800000> : vector<8x128xf32>
    %31 = vector.multi_reduction <maximumf>, %30, %cst_10 [1] : vector<8x10x128xf32> to vector<8x128xf32>
    %32 = vector.extract_strided_slice %27 {offsets = [0, 0, 256], sizes = [8, 8, 128], strides = [1, 1, 1]} : vector<8x16x384xf32> to vector<8x8x128xf32>
    %cst_11 = arith.constant dense<0xFF800000> : vector<8x128xf32>
    %33 = vector.multi_reduction <maximumf>, %32, %cst_11 [1] : vector<8x8x128xf32> to vector<8x128xf32>
    %34 = tpu.concatenate %29, %31, %33 in 1 : vector<8x128xf32>, vector<8x128xf32>, vector<8x128xf32> -> vector<8x384xf32>
    %c0_12 = arith.constant 0 : index
    %c0_13 = arith.constant 0 : index
    %35 = vector.load %arg5[%c0_12, %c0_13] : memref<384x128xf32, #tpu.memory_space<vmem>>, vector<384x128xf32>
    %cst_14 = arith.constant dense<0.000000e+00> : vector<8x128xf32>
    %36 = tpu.matmul %34, %35, %cst_14 {dimension_numbers = #tpu.dot_dimension_numbers<[1], [0], [0], [1], [0, 0, 1, 1], [], []>} : vector<8x384xf32>, vector<384x128xf32>, vector<8x128xf32> -> vector<8x128xf32>
    %c0_15 = arith.constant 0 : index
    %c0_16 = arith.constant 0 : index
    %37 = vector.load %arg6[%c0_15, %c0_16] : memref<1x128xf32, #tpu.memory_space<vmem>>, vector<1x128xf32>
    %38 = vector.broadcast %37 : vector<1x128xf32> to vector<8x128xf32>
    %39 = arith.addf %36, %38 : vector<8x128xf32>
    %cst_17 = arith.constant 0.000000e+00 : f32
    %40 = vector.broadcast %cst_17 : f32 to vector<8x128xf32>
    %41 = arith.maximumf %39, %40 : vector<8x128xf32>
    %c0_18 = arith.constant 0 : index
    %c0_19 = arith.constant 0 : index
    %42 = vector.load %arg7[%c0_18, %c0_19] : memref<128x128xf32, #tpu.memory_space<vmem>>, vector<128x128xf32>
    %cst_20 = arith.constant dense<0.000000e+00> : vector<8x128xf32>
    %43 = tpu.matmul %41, %42, %cst_20 {dimension_numbers = #tpu.dot_dimension_numbers<[1], [0], [0], [1], [0, 0, 1, 1], [], []>} : vector<8x128xf32>, vector<128x128xf32>, vector<8x128xf32> -> vector<8x128xf32>
    %c0_21 = arith.constant 0 : index
    %c0_22 = arith.constant 0 : index
    %44 = vector.load %arg8[%c0_21, %c0_22] : memref<1x128xf32, #tpu.memory_space<vmem>>, vector<1x128xf32>
    %45 = vector.broadcast %44 : vector<1x128xf32> to vector<8x128xf32>
    %46 = arith.addf %43, %45 : vector<8x128xf32>
    %c0_23 = arith.constant 0 : index
    %c0_24 = arith.constant 0 : index
    %47 = vector.load %arg9[%c0_23, %c0_24] : memref<8x128xf32, #tpu.memory_space<vmem>>, vector<8x128xf32>
    tpu.vector_store %arg9[%c0_23, %c0_24], %46 {strides = array<i32>} : memref<8x128xf32, #tpu.memory_space<vmem>>, vector<8x128xf32>,
    return
  }
  func.func @transform_0(%arg0: i32) -> (i32, i32) {
    %c0_i32 = arith.constant 0 : i32
    %c0_i32_0 = arith.constant 0 : i32
    return %arg0, %c0_i32 : i32, i32
  }
  func.func @transform_1(%arg0: i32) -> (i32, i32) {
    %c0_i32 = arith.constant 0 : i32
    %c0_i32_0 = arith.constant 0 : i32
    %c0_i32_1 = arith.constant 0 : i32
    return %c0_i32, %c0_i32_0 : i32, i32
  }
  func.func @transform_2(%arg0: i32) -> (i32, i32) {
    %c0_i32 = arith.constant 0 : i32
    %c0_i32_0 = arith.constant 0 : i32
    %c0_i32_1 = arith.constant 0 : i32
    return %c0_i32, %c0_i32_0 : i32, i32
  }
  func.func @transform_3(%arg0: i32) -> (i32, i32) {
    %c0_i32 = arith.constant 0 : i32
    %c0_i32_0 = arith.constant 0 : i32
    %c0_i32_1 = arith.constant 0 : i32
    return %c0_i32, %c0_i32_0 : i32, i32
  }
  func.func @transform_4(%arg0: i32) -> (i32, i32) {
    %c0_i32 = arith.constant 0 : i32
    %c0_i32_0 = arith.constant 0 : i32
    %c0_i32_1 = arith.constant 0 : i32
    return %c0_i32, %c0_i32_0 : i32, i32
  }
  func.func @transform_5(%arg0: i32) -> (i32, i32) {
    %c0_i32 = arith.constant 0 : i32
    %c0_i32_0 = arith.constant 0 : i32
    %c0_i32_1 = arith.constant 0 : i32
    return %c0_i32, %c0_i32_0 : i32, i32
  }
  func.func @transform_6(%arg0: i32) -> (i32, i32) {
    %c0_i32 = arith.constant 0 : i32
    %c0_i32_0 = arith.constant 0 : i32
    %c0_i32_1 = arith.constant 0 : i32
    return %c0_i32, %c0_i32_0 : i32, i32
  }
  func.func @transform_7(%arg0: i32) -> (i32, i32) {
    %c0_i32 = arith.constant 0 : i32
    %c0_i32_0 = arith.constant 0 : i32
    %c0_i32_1 = arith.constant 0 : i32
    return %c0_i32, %c0_i32_0 : i32, i32
  }
  func.func @transform_8(%arg0: i32) -> (i32, i32) {
    %c0_i32 = arith.constant 0 : i32
    %c0_i32_0 = arith.constant 0 : i32
    return %arg0, %c0_i32 : i32, i32
  }
}

</mosaic_0001>

<llo_original>
// kernel: tpu_custom_call.1
$region0: #{tpu_custom_call.1}
  #allocation0 [shape = 'u32[]', space=smem, size = 0x4, offset = 0x4, fixed_abs, tag = 'smem constant byte address 0x4 - core index']
  #allocation1 [shape = 'u32[144,128]{1,0:T(1,128)}', space=vmem, size = 0x12000, scoped, tag = 'internal scratch']
  %s0 = inlined_call_operand.vmem [shape: s32[192,1], index: 0, kind: input, shape index: {}]
  %s1 = inlined_call_operand.vmem [shape: f32[128,32], index: 1, kind: input, shape index: {}]
  %s2 = inlined_call_operand.hbm [shape: f32[160,384], index: 2, kind: input, shape index: {}]
  %s3 = inlined_call_operand.vmem [shape: f32[1,384], index: 3, kind: input, shape index: {}]
  %s4 = inlined_call_operand.hbm [shape: f32[384,128], index: 4, kind: input, shape index: {}]
  %s5 = inlined_call_operand.vmem [shape: f32[1,128], index: 5, kind: input, shape index: {}]
  %s6 = inlined_call_operand.vmem [shape: f32[128,128], index: 6, kind: input, shape index: {}]
  %s7 = inlined_call_operand.vmem [shape: f32[1,128], index: 7, kind: input, shape index: {}]
  %s8 = inlined_call_operand.hbm [shape: f32[8,128], index: 8, kind: output, shape index: {}]
  %s9 = sld [smem:[#allocation0]]
  $region50: #{tpu_custom_call.1} parent=0
    _
  %s11 = ssub.s32 1, %s9
  %s12 = scalar_select 0, %s11, %s9
  $region1: #{tpu_custom_call.1} parent=0
    #allocation2 [shape = 'u8[245760]{0}', space=vmem, size = 0x3c000, scoped, tag = 'input window, operand 2, single buffered']
    #allocation3 [shape = 's32[1]{0}', space=sflag, size = 0x4, scoped, tag = 'scoped memory for tpu_custom_call.1']
    #allocation4 [shape = 's32[1]{0}', space=sflag, size = 0x4, scoped, tag = 'scoped memory for tpu_custom_call.1']
    #allocation5 [shape = 'u8[196608]{0}', space=vmem, size = 0x30000, scoped, tag = 'input window, operand 4, single buffered']
    #allocation6 [shape = 's32[1]{0}', space=sflag, size = 0x4, scoped, tag = 'scoped memory for tpu_custom_call.1']
    #allocation7 [shape = 'u8[4096]{0}', space=vmem, size = 0x1000, scoped, tag = 'output window, operand 0, single buffered']
    %13 = vsyncpa [#allocation3], 0
    %14 = vsyncpa [#allocation6], 0
    %15 = vsyncpa [#allocation4], 0
    // Predicated region
    $region2: #{tpu_custom_call.1} parent=1 // pred_check
      _
    $region3: #{tpu_custom_call.1} parent=1 // pred_check_branch
      %17 = sbr.rel (0) target = $region5
    $region4: #{tpu_custom_call.1} parent=1 // pred_region
      _
    $region5: #{tpu_custom_call.1} parent=1 // pred_fallthru
      _
    // Predicated region
    $region6: #{tpu_custom_call.1} parent=1 // pred_check
      _
    $region7: #{tpu_custom_call.1} parent=1 // pred_check_branch
      %19 = sbr.rel (0) target = $region9
    $region8: #{tpu_custom_call.1} parent=1 // pred_region
      _
    $region9: #{tpu_custom_call.1} parent=1 // pred_fallthru
      _
    // Predicated region
    $region10: #{tpu_custom_call.1} parent=1 // pred_check
      _
    $region11: #{tpu_custom_call.1} parent=1 // pred_check_branch
      %21 = sbr.rel (0) target = $region13
    $region12: #{tpu_custom_call.1} parent=1 // pred_region
      %s23 = ssub.s32 7680, 7680
      %24 = vsyncadd [#allocation3], %s23
      %s25 = sshll.u32 [#allocation2], 4
      %s26 = int_to_ptr.vmem [resolvable:$true] %s25
      %31 = dma.hbm_to_vmem [thread:$0]  %s2, 7680, %s26, [#allocation3], 384, 384, 24
    $region13: #{tpu_custom_call.1} parent=1 // pred_fallthru
      _
    // Predicated region
    $region14: #{tpu_custom_call.1} parent=1 // pred_check
      _
    $region15: #{tpu_custom_call.1} parent=1 // pred_check_branch
      %33 = sbr.rel (0) target = $region17
    $region16: #{tpu_custom_call.1} parent=1 // pred_region
      _
    $region17: #{tpu_custom_call.1} parent=1 // pred_fallthru
      _
    // Predicated region
    $region18: #{tpu_custom_call.1} parent=1 // pred_check
      _
    $region19: #{tpu_custom_call.1} parent=1 // pred_check_branch
      %35 = sbr.rel (0) target = $region21
    $region20: #{tpu_custom_call.1} parent=1 // pred_region
      %s37 = ssub.s32 6144, 6144
      %38 = vsyncadd [#allocation6], %s37
      %s39 = sshll.u32 [#allocation5], 4
      %s40 = int_to_ptr.vmem [resolvable:$true] %s39
      %45 = dma.hbm_to_vmem [thread:$0]  %s4, 6144, %s40, [#allocation6], 128, 128, 8
    $region21: #{tpu_custom_call.1} parent=1 // pred_fallthru
      _
    // Predicated region
    $region22: #{tpu_custom_call.1} parent=1 // pred_check
      _
    $region23: #{tpu_custom_call.1} parent=1 // pred_check_branch
      %47 = sbr.rel (0) target = $region25
    $region24: #{tpu_custom_call.1} parent=1 // pred_region
      _
    $region25: #{tpu_custom_call.1} parent=1 // pred_fallthru
      _
    // Predicated region
    $region26: #{tpu_custom_call.1} parent=1 // pred_check
      _
    $region27: #{tpu_custom_call.1} parent=1 // pred_check_branch
      %49 = sbr.rel (0) target = $region29
    $region28: #{tpu_custom_call.1} parent=1 // pred_region
      _
    $region29: #{tpu_custom_call.1} parent=1 // pred_fallthru
      _
    // Predicated region
    $region30: #{tpu_custom_call.1} parent=1 // pred_check
      _
    $region31: #{tpu_custom_call.1} parent=1 // pred_check_branch
      %51 = sbr.rel (0) target = $region33
    $region32: #{tpu_custom_call.1} parent=1 // pred_region
      _
    $region33: #{tpu_custom_call.1} parent=1 // pred_fallthru
      _
    // Predicated region
    $region34: #{tpu_custom_call.1} parent=1 // pred_check
      _
    $region35: #{tpu_custom_call.1} parent=1 // pred_check_branch
      %53 = sbr.rel (0) target = $region37
    $region36: #{tpu_custom_call.1} parent=1 // pred_region
      %54 = dma.done [#allocation3], 7680
    $region37: #{tpu_custom_call.1} parent=1 // pred_fallthru
      _
    // Predicated region
    $region38: #{tpu_custom_call.1} parent=1 // pred_check
      _
    $region39: #{tpu_custom_call.1} parent=1 // pred_check_branch
      %56 = sbr.rel (0) target = $region41
    $region40: #{tpu_custom_call.1} parent=1 // pred_region
      %57 = dma.done [#allocation6], 6144
    $region41: #{tpu_custom_call.1} parent=1 // pred_fallthru
      _
    %v58 = vlaneseq
    %v59 = vand.u32 %v58, 127
    %v60 = vld [vmem:[%s0] sm:$0xff]
    %v61 = vld [vmem:[%s0 + $0x8] sm:$0xff]
    %v62 = vld [vmem:[%s0 + $0x10] sm:$0xff]
    %v63 = vld [vmem:[%s0 + $0x18] sm:$0xff]
    %v64 = vld [vmem:[%s0 + $0x20] sm:$0xff]
    %v65 = vld [vmem:[%s0 + $0x28] sm:$0xff]
    %v66 = vld [vmem:[%s0 + $0x30] sm:$0xff]
    %v67 = vld [vmem:[%s0 + $0x38] sm:$0xff]
    %v68 = vld [vmem:[%s0 + $0x40] sm:$0xff]
    %v69 = vld [vmem:[%s0 + $0x48] sm:$0xff]
    %v70 = vld [vmem:[%s0 + $0x50] sm:$0xff]
    %v71 = vld [vmem:[%s0 + $0x58] sm:$0xff]
    %v72 = vld [vmem:[%s0 + $0x60] sm:$0xff]
    %v73 = vld [vmem:[%s0 + $0x68] sm:$0xff]
    %v74 = vld [vmem:[%s0 + $0x70] sm:$0xff]
    %v75 = vld [vmem:[%s0 + $0x78] sm:$0xff]
    %v76 = vld [vmem:[%s0 + $0x80] sm:$0xff]
    %v77 = vld [vmem:[%s0 + $0x88] sm:$0xff]
    %v78 = vld [vmem:[%s0 + $0x90] sm:$0xff]
    %v79 = vld [vmem:[%s0 + $0x98] sm:$0xff]
    %v80 = vld [vmem:[%s0 + $0xa0] sm:$0xff]
    %v81 = vld [vmem:[%s0 + $0xa8] sm:$0xff]
    %v82 = vld [vmem:[%s0 + $0xb0] sm:$0xff]
    %v83 = vld [vmem:[%s0 + $0xb8] sm:$0xff]
    %84 = vset.pattern.permute.xlu0 0
    %85 = vperm.xlu0 %84, %v60
    %v86 = vpop.permute.xlu0 %85
    %87 = vset.pattern.permute.xlu0 0
    %88 = vperm.xlu0 %87, %v61
    %v89 = vpop.permute.xlu0 %88
    %90 = vset.pattern.permute.xlu0 0
    %91 = vperm.xlu0 %90, %v62
    %v92 = vpop.permute.xlu0 %91
    %93 = vset.pattern.permute.xlu0 0
    %94 = vperm.xlu0 %93, %v63
    %v95 = vpop.permute.xlu0 %94
    %96 = vset.pattern.permute.xlu0 0
    %97 = vperm.xlu0 %96, %v64
    %v98 = vpop.permute.xlu0 %97
    %99 = vset.pattern.permute.xlu0 0
    %100 = vperm.xlu0 %99, %v65
    %v101 = vpop.permute.xlu0 %100
    %102 = vset.pattern.permute.xlu0 0
    %103 = vperm.xlu0 %102, %v66
    %v104 = vpop.permute.xlu0 %103
    %105 = vset.pattern.permute.xlu0 0
    %106 = vperm.xlu0 %105, %v67
    %v107 = vpop.permute.xlu0 %106
    %108 = vset.pattern.permute.xlu0 0
    %109 = vperm.xlu0 %108, %v68
    %v110 = vpop.permute.xlu0 %109
    %111 = vset.pattern.permute.xlu0 0
    %112 = vperm.xlu0 %111, %v69
    %v113 = vpop.permute.xlu0 %112
    %114 = vset.pattern.permute.xlu0 0
    %115 = vperm.xlu0 %114, %v70
    %v116 = vpop.permute.xlu0 %115
    %117 = vset.pattern.permute.xlu0 0
    %118 = vperm.xlu0 %117, %v71
    %v119 = vpop.permute.xlu0 %118
    %120 = vset.pattern.permute.xlu0 0
    %121 = vperm.xlu0 %120, %v72
    %v122 = vpop.permute.xlu0 %121
    %123 = vset.pattern.permute.xlu0 0
    %124 = vperm.xlu0 %123, %v73
    %v125 = vpop.permute.xlu0 %124
    %126 = vset.pattern.permute.xlu0 0
    %127 = vperm.xlu0 %126, %v74
    %v128 = vpop.permute.xlu0 %127
    %129 = vset.pattern.permute.xlu0 0
    %130 = vperm.xlu0 %129, %v75
    %v131 = vpop.permute.xlu0 %130
    %132 = vset.pattern.permute.xlu0 0
    %133 = vperm.xlu0 %132, %v76
    %v134 = vpop.permute.xlu0 %133
    %135 = vset.pattern.permute.xlu0 0
    %136 = vperm.xlu0 %135, %v77
    %v137 = vpop.permute.xlu0 %136
    %138 = vset.pattern.permute.xlu0 0
    %139 = vperm.xlu0 %138, %v78
    %v140 = vpop.permute.xlu0 %139
    %141 = vset.pattern.permute.xlu0 0
    %142 = vperm.xlu0 %141, %v79
    %v143 = vpop.permute.xlu0 %142
    %144 = vset.pattern.permute.xlu0 0
    %145 = vperm.xlu0 %144, %v80
    %v146 = vpop.permute.xlu0 %145
    %147 = vset.pattern.permute.xlu0 0
    %148 = vperm.xlu0 %147, %v81
    %v149 = vpop.permute.xlu0 %148
    %150 = vset.pattern.permute.xlu0 0
    %151 = vperm.xlu0 %150, %v82
    %v152 = vpop.permute.xlu0 %151
    %153 = vset.pattern.permute.xlu0 0
    %154 = vperm.xlu0 %153, %v83
    %v155 = vpop.permute.xlu0 %154
    %vm156 = vcmp.eq.s32.totalorder %v59, %v86
    %vm157 = vcmp.eq.s32.totalorder %v59, %v89
    %vm158 = vcmp.eq.s32.totalorder %v59, %v92
    %vm159 = vcmp.eq.s32.totalorder %v59, %v95
    %vm160 = vcmp.eq.s32.totalorder %v59, %v98
    %vm161 = vcmp.eq.s32.totalorder %v59, %v101
    %vm162 = vcmp.eq.s32.totalorder %v59, %v104
    %vm163 = vcmp.eq.s32.totalorder %v59, %v107
    %vm164 = vcmp.eq.s32.totalorder %v59, %v110
    %vm165 = vcmp.eq.s32.totalorder %v59, %v113
    %vm166 = vcmp.eq.s32.totalorder %v59, %v116
    %vm167 = vcmp.eq.s32.totalorder %v59, %v119
    %vm168 = vcmp.eq.s32.totalorder %v59, %v122
    %vm169 = vcmp.eq.s32.totalorder %v59, %v125
    %vm170 = vcmp.eq.s32.totalorder %v59, %v128
    %vm171 = vcmp.eq.s32.totalorder %v59, %v131
    %vm172 = vcmp.eq.s32.totalorder %v59, %v134
    %vm173 = vcmp.eq.s32.totalorder %v59, %v137
    %vm174 = vcmp.eq.s32.totalorder %v59, %v140
    %vm175 = vcmp.eq.s32.totalorder %v59, %v143
    %vm176 = vcmp.eq.s32.totalorder %v59, %v146
    %vm177 = vcmp.eq.s32.totalorder %v59, %v149
    %vm178 = vcmp.eq.s32.totalorder %v59, %v152
    %vm179 = vcmp.eq.s32.totalorder %v59, %v155
    %v180 = vsel %vm156, 1, 0
    %v181 = vsel %vm157, 1, 0
    %v182 = vsel %vm158, 1, 0
    %v183 = vsel %vm159, 1, 0
    %v184 = vsel %vm160, 1, 0
    %v185 = vsel %vm161, 1, 0
    %v186 = vsel %vm162, 1, 0
    %v187 = vsel %vm163, 1, 0
    %v188 = vsel %vm164, 1, 0
    %v189 = vsel %vm165, 1, 0
    %v190 = vsel %vm166, 1, 0
    %v191 = vsel %vm167, 1, 0
    %v192 = vsel %vm168, 1, 0
    %v193 = vsel %vm169, 1, 0
    %v194 = vsel %vm170, 1, 0
    %v195 = vsel %vm171, 1, 0
    %v196 = vsel %vm172, 1, 0
    %v197 = vsel %vm173, 1, 0
    %v198 = vsel %vm174, 1, 0
    %v199 = vsel %vm175, 1, 0
    %v200 = vsel %vm176, 1, 0
    %v201 = vsel %vm177, 1, 0
    %v202 = vsel %vm178, 1, 0
    %v203 = vsel %vm179, 1, 0
    %v204 = vcvt.s32.f32 %v180
    %v205 = vcvt.s32.f32 %v181
    %v206 = vcvt.s32.f32 %v182
    %v207 = vcvt.s32.f32 %v183
    %v208 = vcvt.s32.f32 %v184
    %v209 = vcvt.s32.f32 %v185
    %v210 = vcvt.s32.f32 %v186
    %v211 = vcvt.s32.f32 %v187
    %v212 = vcvt.s32.f32 %v188
    %v213 = vcvt.s32.f32 %v189
    %v214 = vcvt.s32.f32 %v190
    %v215 = vcvt.s32.f32 %v191
    %v216 = vcvt.s32.f32 %v192
    %v217 = vcvt.s32.f32 %v193
    %v218 = vcvt.s32.f32 %v194
    %v219 = vcvt.s32.f32 %v195
    %v220 = vcvt.s32.f32 %v196
    %v221 = vcvt.s32.f32 %v197
    %v222 = vcvt.s32.f32 %v198
    %v223 = vcvt.s32.f32 %v199
    %v224 = vcvt.s32.f32 %v200
    %v225 = vcvt.s32.f32 %v201
    %v226 = vcvt.s32.f32 %v202
    %v227 = vcvt.s32.f32 %v203
    %v228 = vld [vmem:[%s1] sm:$0xff]
    %v229 = vld [vmem:[%s1 + $0x8] sm:$0xff]
    %v230 = vld [vmem:[%s1 + $0x10] sm:$0xff]
    %v231 = vld [vmem:[%s1 + $0x18] sm:$0xff]
    %v232 = vld [vmem:[%s1 + $0x20] sm:$0xff]
    %v233 = vld [vmem:[%s1 + $0x28] sm:$0xff]
    %v234 = vld [vmem:[%s1 + $0x30] sm:$0xff]
    %v235 = vld [vmem:[%s1 + $0x38] sm:$0xff]
    %v236 = vld [vmem:[%s1 + $0x40] sm:$0xff]
    %v237 = vld [vmem:[%s1 + $0x48] sm:$0xff]
    %v238 = vld [vmem:[%s1 + $0x50] sm:$0xff]
    %v239 = vld [vmem:[%s1 + $0x58] sm:$0xff]
    %v240 = vld [vmem:[%s1 + $0x60] sm:$0xff]
    %v241 = vld [vmem:[%s1 + $0x68] sm:$0xff]
    %v242 = vld [vmem:[%s1 + $0x70] sm:$0xff]
    %v243 = vld [vmem:[%s1 + $0x78] sm:$0xff]
    %244 = vmatprep.subr.mxu0 0.0
    %245 = vmatpush1.msra.mxu0 %v228
    %246 = vmatprep.subr.mxu0 0.0
    %247 = vmatpush1.msra.mxu0 %v229
    %248 = vmatprep.subr.mxu0 0.0
    %249 = vmatpush1.msra.mxu0 %v230
    %250 = vmatprep.subr.mxu0 0.0
    %251 = vmatpush1.msra.mxu0 %v231
    %252 = vmatprep.subr.mxu0 0.0
    %253 = vmatpush1.msra.mxu0 %v232
    %254 = vmatprep.subr.mxu0 0.0
    %255 = vmatpush1.msra.mxu0 %v233
    %256 = vmatprep.subr.mxu0 0.0
    %257 = vmatpush1.msra.mxu0 %v234
    %258 = vmatprep.subr.mxu0 0.0
    %259 = vmatpush1.msra.mxu0 %v235
    %260 = vmatprep.subr.mxu0 0.0
    %261 = vmatpush1.msra.mxu0 %v236
    %262 = vmatprep.subr.mxu0 0.0
    %263 = vmatpush1.msra.mxu0 %v237
    %264 = vmatprep.subr.mxu0 0.0
    %265 = vmatpush1.msra.mxu0 %v238
    %266 = vmatprep.subr.mxu0 0.0
    %267 = vmatpush1.msra.mxu0 %v239
    %268 = vmatprep.subr.mxu0 0.0
    %269 = vmatpush1.msra.mxu0 %v240
    %270 = vmatprep.subr.mxu0 0.0
    %271 = vmatpush1.msra.mxu0 %v241
    %272 = vmatprep.subr.mxu0 0.0
    %273 = vmatpush1.msra.mxu0 %v242
    %274 = vmatprep.subr.mxu0 0.0
    %275 = vmatpush1.msra.mxu0 %v243
    %276 = vmatprep.subr.mxu0 0.0
    %277 = vmatpush1.msra.mxu0 0.0
    %278 = vmatprep.subr.mxu0 0.0
    %279 = vmatpush1.msra.mxu0 0.0
    %280 = vmatprep.subr.mxu0 0.0
    %281 = vmatpush1.msra.mxu0 0.0
    %282 = vmatprep.subr.mxu0 0.0
    %283 = vmatpush1.msra.mxu0 0.0
    %284 = vmatprep.subr.mxu0 0.0
    %285 = vmatpush1.msra.mxu0 0.0
    %286 = vmatprep.subr.mxu0 0.0
    %287 = vmatpush1.msra.mxu0 0.0
    %288 = vmatprep.subr.mxu0 0.0
    %289 = vmatpush1.msra.mxu0 0.0
    %290 = vmatprep.subr.mxu0 0.0
    %291 = vmatpush1.msra.mxu0 0.0
    %292 = vmatprep.subr.mxu0 0.0
    %293 = vmatpush1.msra.mxu0 0.0
    %294 = vmatprep.subr.mxu0 0.0
    %295 = vmatpush1.msra.mxu0 0.0
    %296 = vmatprep.subr.mxu0 0.0
    %297 = vmatpush1.msra.mxu0 0.0
    %298 = vmatprep.subr.mxu0 0.0
    %299 = vmatpush1.msra.mxu0 0.0
    %300 = vmatprep.subr.mxu0 0.0
    %301 = vmatpush1.msra.mxu0 0.0
    %302 = vmatprep.subr.mxu0 0.0
    %303 = vmatpush1.msra.mxu0 0.0
    %304 = vmatprep.subr.mxu0 0.0
    %305 = vmatpush1.msra.mxu0 0.0
    %306 = vmatprep.subr.mxu0 0.0
    %307 = vmatpush1.msra.mxu0 0.0
    %308 = vmatprep.mubr.f32.mxu0 0.0
    %309 = vmatmul.mubr.f32.gmra.mrb[0].mxu0 %v204
    %v310 = vpop.f32.mrb[0].mxu0
    %v311 = vadd.f32 0.0, %v310
    %v312 = vpop.f32.mrb[0].mxu0
    %313 = vmatprep.mubr.f32.mxu0 0.0
    %314 = vmatmul.mubr.f32.gmra.mrb[0].mxu0 %v205
    %v315 = vpop.f32.mrb[0].mxu0
    %v316 = vadd.f32 0.0, %v315
    %v317 = vpop.f32.mrb[0].mxu0
    %318 = vmatprep.mubr.f32.mxu0 0.0
    %319 = vmatmul.mubr.f32.gmra.mrb[0].mxu0 %v206
    %v320 = vpop.f32.mrb[0].mxu0
    %v321 = vadd.f32 0.0, %v320
    %v322 = vpop.f32.mrb[0].mxu0
    %323 = vmatprep.mubr.f32.mxu0 0.0
    %324 = vmatmul.mubr.f32.gmra.mrb[0].mxu0 %v207
    %v325 = vpop.f32.mrb[0].mxu0
    %v326 = vadd.f32 0.0, %v325
    %v327 = vpop.f32.mrb[0].mxu0
    %328 = vmatprep.mubr.f32.mxu0 0.0
    %329 = vmatmul.mubr.f32.gmra.mrb[0].mxu0 %v208
    %v330 = vpop.f32.mrb[0].mxu0
    %v331 = vadd.f32 0.0, %v330
    %v332 = vpop.f32.mrb[0].mxu0
    %333 = vmatprep.mubr.f32.mxu0 0.0
    %334 = vmatmul.mubr.f32.gmra.mrb[0].mxu0 %v209
    %v335 = vpop.f32.mrb[0].mxu0
    %v336 = vadd.f32 0.0, %v335
    %v337 = vpop.f32.mrb[0].mxu0
    %338 = vmatprep.mubr.f32.mxu0 0.0
    %339 = vmatmul.mubr.f32.gmra.mrb[0].mxu0 %v210
    %v340 = vpop.f32.mrb[0].mxu0
    %v341 = vadd.f32 0.0, %v340
    %v342 = vpop.f32.mrb[0].mxu0
    %343 = vmatprep.mubr.f32.mxu0 0.0
    %344 = vmatmul.mubr.f32.gmra.mrb[0].mxu0 %v211
    %v345 = vpop.f32.mrb[0].mxu0
    %v346 = vadd.f32 0.0, %v345
    %v347 = vpop.f32.mrb[0].mxu0
    %348 = vmatprep.mubr.f32.mxu0 0.0
    %349 = vmatmul.mubr.f32.gmra.mrb[0].mxu0 %v212
    %v350 = vpop.f32.mrb[0].mxu0
    %v351 = vadd.f32 0.0, %v350
    %v352 = vpop.f32.mrb[0].mxu0
    %353 = vmatprep.mubr.f32.mxu0 0.0
    %354 = vmatmul.mubr.f32.gmra.mrb[0].mxu0 %v213
    %v355 = vpop.f32.mrb[0].mxu0
    %v356 = vadd.f32 0.0, %v355
    %v357 = vpop.f32.mrb[0].mxu0
    %358 = vmatprep.mubr.f32.mxu0 0.0
    %359 = vmatmul.mubr.f32.gmra.mrb[0].mxu0 %v214
    %v360 = vpop.f32.mrb[0].mxu0
    %v361 = vadd.f32 0.0, %v360
    %v362 = vpop.f32.mrb[0].mxu0
    %363 = vmatprep.mubr.f32.mxu0 0.0
    %364 = vmatmul.mubr.f32.gmra.mrb[0].mxu0 %v215
    %v365 = vpop.f32.mrb[0].mxu0
    %v366 = vadd.f32 0.0, %v365
    %v367 = vpop.f32.mrb[0].mxu0
    %368 = vmatprep.mubr.f32.mxu0 0.0
    %369 = vmatmul.mubr.f32.gmra.mrb[0].mxu0 %v216
    %v370 = vpop.f32.mrb[0].mxu0
    %v371 = vadd.f32 0.0, %v370
    %v372 = vpop.f32.mrb[0].mxu0
    %373 = vmatprep.mubr.f32.mxu0 0.0
    %374 = vmatmul.mubr.f32.gmra.mrb[0].mxu0 %v217
    %v375 = vpop.f32.mrb[0].mxu0
    %v376 = vadd.f32 0.0, %v375
    %v377 = vpop.f32.mrb[0].mxu0
    %378 = vmatprep.mubr.f32.mxu0 0.0
    %379 = vmatmul.mubr.f32.gmra.mrb[0].mxu0 %v218
    %v380 = vpop.f32.mrb[0].mxu0
    %v381 = vadd.f32 0.0, %v380
    %v382 = vpop.f32.mrb[0].mxu0
    %383 = vmatprep.mubr.f32.mxu0 0.0
    %384 = vmatmul.mubr.f32.gmra.mrb[0].mxu0 %v219
    %v385 = vpop.f32.mrb[0].mxu0
    %v386 = vadd.f32 0.0, %v385
    %v387 = vpop.f32.mrb[0].mxu0
    %388 = vmatprep.mubr.f32.mxu0 0.0
    %389 = vmatmul.mubr.f32.gmra.mrb[0].mxu0 %v220
    %v390 = vpop.f32.mrb[0].mxu0
    %v391 = vadd.f32 0.0, %v390
    %v392 = vpop.f32.mrb[0].mxu0
    %393 = vmatprep.mubr.f32.mxu0 0.0
    %394 = vmatmul.mubr.f32.gmra.mrb[0].mxu0 %v221
    %v395 = vpop.f32.mrb[0].mxu0
    %v396 = vadd.f32 0.0, %v395
    %v397 = vpop.f32.mrb[0].mxu0
    %398 = vmatprep.mubr.f32.mxu0 0.0
    %399 = vmatmul.mubr.f32.gmra.mrb[0].mxu0 %v222
    %v400 = vpop.f32.mrb[0].mxu0
    %v401 = vadd.f32 0.0, %v400
    %v402 = vpop.f32.mrb[0].mxu0
    %403 = vmatprep.mubr.f32.mxu0 0.0
    %404 = vmatmul.mubr.f32.gmra.mrb[0].mxu0 %v223
    %v405 = vpop.f32.mrb[0].mxu0
    %v406 = vadd.f32 0.0, %v405
    %v407 = vpop.f32.mrb[0].mxu0
    %408 = vmatprep.mubr.f32.mxu0 0.0
    %409 = vmatmul.mubr.f32.gmra.mrb[0].mxu0 %v224
    %v410 = vpop.f32.mrb[0].mxu0
    %v411 = vadd.f32 0.0, %v410
    %v412 = vpop.f32.mrb[0].mxu0
    %413 = vmatprep.mubr.f32.mxu0 0.0
    %414 = vmatmul.mubr.f32.gmra.mrb[0].mxu0 %v225
    %v415 = vpop.f32.mrb[0].mxu0
    %v416 = vadd.f32 0.0, %v415
    %v417 = vpop.f32.mrb[0].mxu0
    %418 = vmatprep.mubr.f32.mxu0 0.0
    %419 = vmatmul.mubr.f32.gmra.mrb[0].mxu0 %v226
    %v420 = vpop.f32.mrb[0].mxu0
    %v421 = vadd.f32 0.0, %v420
    %v422 = vpop.f32.mrb[0].mxu0
    %423 = vmatprep.mubr.f32.mxu0 0.0
    %424 = vmatmul.mubr.f32.gmra.mrb[0].mxu0 %v227
    %v425 = vpop.f32.mrb[0].mxu0
    %v426 = vadd.f32 0.0, %v425
    %v427 = vpop.f32.mrb[0].mxu0
    %428 = vdwg.mxu0
    %vm453 = vcmask 1046528
    %v454 = vrot.slane %v311, 1
    %v455 = vrot.slane %v316, 1
    %v456 = vsel %vm453, %v454, %v455
    %v457 = vrot.slane %v321, 1
    %v458 = vsel %vm453, %v455, %v457
    %v459 = vrot.slane %v326, 1
    %v460 = vrot.slane %v331, 1
    %v461 = vsel %vm453, %v459, %v460
    %v462 = vrot.slane %v336, 1
    %v463 = vsel %vm453, %v460, %v462
    %v464 = vrot.slane %v341, 1
    %v465 = vrot.slane %v346, 1
    %v466 = vsel %vm453, %v464, %v465
    %v467 = vrot.slane %v351, 1
    %v468 = vsel %vm453, %v465, %v467
    %v469 = vrot.slane %v356, 1
    %v470 = vrot.slane %v361, 1
    %v471 = vsel %vm453, %v469, %v470
    %v472 = vrot.slane %v366, 1
    %v473 = vsel %vm453, %v470, %v472
    %v474 = vrot.slane %v371, 1
    %v475 = vrot.slane %v376, 1
    %v476 = vsel %vm453, %v474, %v475
    %v477 = vrot.slane %v381, 1
    %v478 = vsel %vm453, %v475, %v477
    %v479 = vrot.slane %v386, 1
    %v480 = vrot.slane %v391, 1
    %v481 = vsel %vm453, %v479, %v480
    %v482 = vrot.slane %v396, 1
    %v483 = vsel %vm453, %v480, %v482
    %v484 = vrot.slane %v401, 1
    %v485 = vrot.slane %v406, 1
    %v486 = vsel %vm453, %v484, %v485
    %v487 = vrot.slane %v411, 1
    %v488 = vsel %vm453, %v485, %v487
    %v489 = vrot.slane %v416, 1
    %v490 = vrot.slane %v421, 1
    %v491 = vsel %vm453, %v489, %v490
    %v492 = vrot.slane %v426, 1
    %v493 = vsel %vm453, %v490, %v492
    %vm494 = vcmask 1045504
    %v495 = vrot.slane %v311, 2
    %v496 = vrot.slane %v316, 2
    %v497 = vsel %vm494, %v495, %v496
    %v498 = vrot.slane %v321, 2
    %v499 = vsel %vm494, %v496, %v498
    %v500 = vrot.slane %v326, 2
    %v501 = vrot.slane %v331, 2
    %v502 = vsel %vm494, %v500, %v501
    %v503 = vrot.slane %v336, 2
    %v504 = vsel %vm494, %v501, %v503
    %v505 = vrot.slane %v341, 2
    %v506 = vrot.slane %v346, 2
    %v507 = vsel %vm494, %v505, %v506
    %v508 = vrot.slane %v351, 2
    %v509 = vsel %vm494, %v506, %v508
    %v510 = vrot.slane %v356, 2
    %v511 = vrot.slane %v361, 2
    %v512 = vsel %vm494, %v510, %v511
    %v513 = vrot.slane %v366, 2
    %v514 = vsel %vm494, %v511, %v513
    %v515 = vrot.slane %v371, 2
    %v516 = vrot.slane %v376, 2
    %v517 = vsel %vm494, %v515, %v516
    %v518 = vrot.slane %v381, 2
    %v519 = vsel %vm494, %v516, %v518
    %v520 = vrot.slane %v386, 2
    %v521 = vrot.slane %v391, 2
    %v522 = vsel %vm494, %v520, %v521
    %v523 = vrot.slane %v396, 2
    %v524 = vsel %vm494, %v521, %v523
    %v525 = vrot.slane %v401, 2
    %v526 = vrot.slane %v406, 2
    %v527 = vsel %vm494, %v525, %v526
    %v528 = vrot.slane %v411, 2
    %v529 = vsel %vm494, %v526, %v528
    %v530 = vrot.slane %v416, 2
    %v531 = vrot.slane %v421, 2
    %v532 = vsel %vm494, %v530, %v531
    %v533 = vrot.slane %v426, 2
    %v534 = vsel %vm494, %v531, %v533
    %vm535 = vcmask 1044480
    %v536 = vrot.slane %v311, 3
    %v537 = vrot.slane %v316, 3
    %v538 = vsel %vm535, %v536, %v537
    %v539 = vrot.slane %v321, 3
    %v540 = vsel %vm535, %v537, %v539
    %v541 = vrot.slane %v326, 3
    %v542 = vrot.slane %v331, 3
    %v543 = vsel %vm535, %v541, %v542
    %v544 = vrot.slane %v336, 3
    %v545 = vsel %vm535, %v542, %v544
    %v546 = vrot.slane %v341, 3
    %v547 = vrot.slane %v346, 3
    %v548 = vsel %vm535, %v546, %v547
    %v549 = vrot.slane %v351, 3
    %v550 = vsel %vm535, %v547, %v549
    %v551 = vrot.slane %v356, 3
    %v552 = vrot.slane %v361, 3
    %v553 = vsel %vm535, %v551, %v552
    %v554 = vrot.slane %v366, 3
    %v555 = vsel %vm535, %v552, %v554
    %v556 = vrot.slane %v371, 3
    %v557 = vrot.slane %v376, 3
    %v558 = vsel %vm535, %v556, %v557
    %v559 = vrot.slane %v381, 3
    %v560 = vsel %vm535, %v557, %v559
    %v561 = vrot.slane %v386, 3
    %v562 = vrot.slane %v391, 3
    %v563 = vsel %vm535, %v561, %v562
    %v564 = vrot.slane %v396, 3
    %v565 = vsel %vm535, %v562, %v564
    %v566 = vrot.slane %v401, 3
    %v567 = vrot.slane %v406, 3
    %v568 = vsel %vm535, %v566, %v567
    %v569 = vrot.slane %v411, 3
    %v570 = vsel %vm535, %v567, %v569
    %v571 = vrot.slane %v416, 3
    %v572 = vrot.slane %v421, 3
    %v573 = vsel %vm535, %v571, %v572
    %v574 = vrot.slane %v426, 3
    %v575 = vsel %vm535, %v572, %v574
    %vm576 = vcmask 1043456
    %v577 = vrot.slane %v311, 4
    %v578 = vrot.slane %v316, 4
    %v579 = vsel %vm576, %v577, %v578
    %v580 = vrot.slane %v321, 4
    %v581 = vsel %vm576, %v578, %v580
    %v582 = vrot.slane %v326, 4
    %v583 = vrot.slane %v331, 4
    %v584 = vsel %vm576, %v582, %v583
    %v585 = vrot.slane %v336, 4
    %v586 = vsel %vm576, %v583, %v585
    %v587 = vrot.slane %v341, 4
    %v588 = vrot.slane %v346, 4
    %v589 = vsel %vm576, %v587, %v588
    %v590 = vrot.slane %v351, 4
    %v591 = vsel %vm576, %v588, %v590
    %v592 = vrot.slane %v356, 4
    %v593 = vrot.slane %v361, 4
    %v594 = vsel %vm576, %v592, %v593
    %v595 = vrot.slane %v366, 4
    %v596 = vsel %vm576, %v593, %v595
    %v597 = vrot.slane %v371, 4
    %v598 = vrot.slane %v376, 4
    %v599 = vsel %vm576, %v597, %v598
    %v600 = vrot.slane %v381, 4
    %v601 = vsel %vm576, %v598, %v600
    %v602 = vrot.slane %v386, 4
    %v603 = vrot.slane %v391, 4
    %v604 = vsel %vm576, %v602, %v603
    %v605 = vrot.slane %v396, 4
    %v606 = vsel %vm576, %v603, %v605
    %v607 = vrot.slane %v401, 4
    %v608 = vrot.slane %v406, 4
    %v609 = vsel %vm576, %v607, %v608
    %v610 = vrot.slane %v411, 4
    %v611 = vsel %vm576, %v608, %v610
    %v612 = vrot.slane %v416, 4
    %v613 = vrot.slane %v421, 4
    %v614 = vsel %vm576, %v612, %v613
    %v615 = vrot.slane %v426, 4
    %v616 = vsel %vm576, %v613, %v615
    %617 = vrot.lane.b32.xlu0 %v456, 32
    %v618 = vpop.permute.xlu0 %617
    %619 = vrot.lane.b32.xlu0 %v458, 32
    %v620 = vpop.permute.xlu0 %619
    %621 = vrot.lane.b32.xlu0 %v461, 32
    %v622 = vpop.permute.xlu0 %621
    %623 = vrot.lane.b32.xlu0 %v463, 32
    %v624 = vpop.permute.xlu0 %623
    %625 = vrot.lane.b32.xlu0 %v466, 32
    %v626 = vpop.permute.xlu0 %625
    %627 = vrot.lane.b32.xlu0 %v468, 32
    %v628 = vpop.permute.xlu0 %627
    %629 = vrot.lane.b32.xlu0 %v471, 32
    %v630 = vpop.permute.xlu0 %629
    %631 = vrot.lane.b32.xlu0 %v473, 32
    %v632 = vpop.permute.xlu0 %631
    %633 = vrot.lane.b32.xlu0 %v476, 32
    %v634 = vpop.permute.xlu0 %633
    %635 = vrot.lane.b32.xlu0 %v478, 32
    %v636 = vpop.permute.xlu0 %635
    %637 = vrot.lane.b32.xlu0 %v481, 32
    %v638 = vpop.permute.xlu0 %637
    %639 = vrot.lane.b32.xlu0 %v483, 32
    %v640 = vpop.permute.xlu0 %639
    %641 = vrot.lane.b32.xlu0 %v486, 32
    %v642 = vpop.permute.xlu0 %641
    %643 = vrot.lane.b32.xlu0 %v488, 32
    %v644 = vpop.permute.xlu0 %643
    %645 = vrot.lane.b32.xlu0 %v491, 32
    %v646 = vpop.permute.xlu0 %645
    %647 = vrot.lane.b32.xlu0 %v493, 32
    %v648 = vpop.permute.xlu0 %647
    %665 = vrot.lane.b32.xlu0 %v497, 64
    %v666 = vpop.permute.xlu0 %665
    %667 = vrot.lane.b32.xlu0 %v499, 64
    %v668 = vpop.permute.xlu0 %667
    %669 = vrot.lane.b32.xlu0 %v502, 64
    %v670 = vpop.permute.xlu0 %669
    %671 = vrot.lane.b32.xlu0 %v504, 64
    %v672 = vpop.permute.xlu0 %671
    %673 = vrot.lane.b32.xlu0 %v507, 64
    %v674 = vpop.permute.xlu0 %673
    %675 = vrot.lane.b32.xlu0 %v509, 64
    %v676 = vpop.permute.xlu0 %675
    %677 = vrot.lane.b32.xlu0 %v512, 64
    %v678 = vpop.permute.xlu0 %677
    %679 = vrot.lane.b32.xlu0 %v514, 64
    %v680 = vpop.permute.xlu0 %679
    %681 = vrot.lane.b32.xlu0 %v517, 64
    %v682 = vpop.permute.xlu0 %681
    %683 = vrot.lane.b32.xlu0 %v519, 64
    %v684 = vpop.permute.xlu0 %683
    %685 = vrot.lane.b32.xlu0 %v522, 64
    %v686 = vpop.permute.xlu0 %685
    %687 = vrot.lane.b32.xlu0 %v524, 64
    %v688 = vpop.permute.xlu0 %687
    %689 = vrot.lane.b32.xlu0 %v527, 64
    %v690 = vpop.permute.xlu0 %689
    %691 = vrot.lane.b32.xlu0 %v529, 64
    %v692 = vpop.permute.xlu0 %691
    %693 = vrot.lane.b32.xlu0 %v532, 64
    %v694 = vpop.permute.xlu0 %693
    %695 = vrot.lane.b32.xlu0 %v534, 64
    %v696 = vpop.permute.xlu0 %695
    %713 = vrot.lane.b32.xlu0 %v538, 96
    %v714 = vpop.permute.xlu0 %713
    %715 = vrot.lane.b32.xlu0 %v540, 96
    %v716 = vpop.permute.xlu0 %715
    %717 = vrot.lane.b32.xlu0 %v543, 96
    %v718 = vpop.permute.xlu0 %717
    %719 = vrot.lane.b32.xlu0 %v545, 96
    %v720 = vpop.permute.xlu0 %719
    %721 = vrot.lane.b32.xlu0 %v548, 96
    %v722 = vpop.permute.xlu0 %721
    %723 = vrot.lane.b32.xlu0 %v550, 96
    %v724 = vpop.permute.xlu0 %723
    %725 = vrot.lane.b32.xlu0 %v553, 96
    %v726 = vpop.permute.xlu0 %725
    %727 = vrot.lane.b32.xlu0 %v555, 96
    %v728 = vpop.permute.xlu0 %727
    %729 = vrot.lane.b32.xlu0 %v558, 96
    %v730 = vpop.permute.xlu0 %729
    %731 = vrot.lane.b32.xlu0 %v560, 96
    %v732 = vpop.permute.xlu0 %731
    %733 = vrot.lane.b32.xlu0 %v563, 96
    %v734 = vpop.permute.xlu0 %733
    %735 = vrot.lane.b32.xlu0 %v565, 96
    %v736 = vpop.permute.xlu0 %735
    %737 = vrot.lane.b32.xlu0 %v568, 96
    %v738 = vpop.permute.xlu0 %737
    %739 = vrot.lane.b32.xlu0 %v570, 96
    %v740 = vpop.permute.xlu0 %739
    %741 = vrot.lane.b32.xlu0 %v573, 96
    %v742 = vpop.permute.xlu0 %741
    %743 = vrot.lane.b32.xlu0 %v575, 96
    %v744 = vpop.permute.xlu0 %743
    %vm761 = vcmask 261120
    %v762 = vsel %vm761, %v311, %v618
    %v763 = vsel %vm761, %v316, %v620
    %v764 = vsel %vm761, %v326, %v622
    %v765 = vsel %vm761, %v331, %v624
    %v766 = vsel %vm761, %v341, %v626
    %v767 = vsel %vm761, %v346, %v628
    %v768 = vsel %vm761, %v356, %v630
    %v769 = vsel %vm761, %v361, %v632
    %v770 = vsel %vm761, %v371, %v634
    %v771 = vsel %vm761, %v376, %v636
    %v772 = vsel %vm761, %v386, %v638
    %v773 = vsel %vm761, %v391, %v640
    %v774 = vsel %vm761, %v401, %v642
    %v775 = vsel %vm761, %v406, %v644
    %v776 = vsel %vm761, %v416, %v646
    %v777 = vsel %vm761, %v421, %v648
    %vm778 = vcmask 523264
    %v779 = vsel %vm778, %v762, %v666
    %v780 = vsel %vm778, %v763, %v668
    %v781 = vsel %vm778, %v764, %v670
    %v782 = vsel %vm778, %v765, %v672
    %v783 = vsel %vm778, %v766, %v674
    %v784 = vsel %vm778, %v767, %v676
    %v785 = vsel %vm778, %v768, %v678
    %v786 = vsel %vm778, %v769, %v680
    %v787 = vsel %vm778, %v770, %v682
    %v788 = vsel %vm778, %v771, %v684
    %v789 = vsel %vm778, %v772, %v686
    %v790 = vsel %vm778, %v773, %v688
    %v791 = vsel %vm778, %v774, %v690
    %v792 = vsel %vm778, %v775, %v692
    %v793 = vsel %vm778, %v776, %v694
    %v794 = vsel %vm778, %v777, %v696
    %vm795 = vcmask 785408
    %v796 = vsel %vm795, %v779, %v714
    %v797 = vsel %vm795, %v780, %v716
    %v798 = vsel %vm795, %v781, %v718
    %v799 = vsel %vm795, %v782, %v720
    %v800 = vsel %vm795, %v783, %v722
    %v801 = vsel %vm795, %v784, %v724
    %v802 = vsel %vm795, %v785, %v726
    %v803 = vsel %vm795, %v786, %v728
    %v804 = vsel %vm795, %v787, %v730
    %v805 = vsel %vm795, %v788, %v732
    %v806 = vsel %vm795, %v789, %v734
    %v807 = vsel %vm795, %v790, %v736
    %v808 = vsel %vm795, %v791, %v738
    %v809 = vsel %vm795, %v792, %v740
    %v810 = vsel %vm795, %v793, %v742
    %v811 = vsel %vm795, %v794, %v744
    %v812 = vld [vmem:[#allocation2] sm:$0xff]
    %v813 = vld [vmem:[#allocation2 + $0x8] sm:$0xff]
    %v814 = vld [vmem:[#allocation2 + $0x10] sm:$0xff]
    %v815 = vld [vmem:[#allocation2 + $0x18] sm:$0xff]
    %v816 = vld [vmem:[#allocation2 + $0x20] sm:$0xff]
    %v817 = vld [vmem:[#allocation2 + $0x28] sm:$0xff]
    %v818 = vld [vmem:[#allocation2 + $0x30] sm:$0xff]
    %v819 = vld [vmem:[#allocation2 + $0x38] sm:$0xff]
    %v820 = vld [vmem:[#allocation2 + $0x40] sm:$0xff]
    %v821 = vld [vmem:[#allocation2 + $0x48] sm:$0xff]
    %v822 = vld [vmem:[#allocation2 + $0x50] sm:$0xff]
    %v823 = vld [vmem:[#allocation2 + $0x58] sm:$0xff]
    %v824 = vld [vmem:[#allocation2 + $0x60] sm:$0xff]
    %v825 = vld [vmem:[#allocation2 + $0x68] sm:$0xff]
    %v826 = vld [vmem:[#allocation2 + $0x70] sm:$0xff]
    %v827 = vld [vmem:[#allocation2 + $0x78] sm:$0xff]
    %v828 = vld [vmem:[#allocation2 + $0x80] sm:$0xff]
    %v829 = vld [vmem:[#allocation2 + $0x88] sm:$0xff]
    %v830 = vld [vmem:[#allocation2 + $0x90] sm:$0xff]
    %v831 = vld [vmem:[#allocation2 + $0x98] sm:$0xff]
    %v832 = vld [vmem:[#allocation2 + $0xa0] sm:$0xff]
    %v833 = vld [vmem:[#allocation2 + $0xa8] sm:$0xff]
    %v834 = vld [vmem:[#allocation2 + $0xb0] sm:$0xff]
    %v835 = vld [vmem:[#allocation2 + $0xb8] sm:$0xff]
    %v836 = vld [vmem:[#allocation2 + $0xc0] sm:$0xff]
    %v837 = vld [vmem:[#allocation2 + $0xc8] sm:$0xff]
    %v838 = vld [vmem:[#allocation2 + $0xd0] sm:$0xff]
    %v839 = vld [vmem:[#allocation2 + $0xd8] sm:$0xff]
    %v840 = vld [vmem:[#allocation2 + $0xe0] sm:$0xff]
    %v841 = vld [vmem:[#allocation2 + $0xe8] sm:$0xff]
    %v842 = vld [vmem:[#allocation2 + $0xf0] sm:$0xff]
    %v843 = vld [vmem:[#allocation2 + $0xf8] sm:$0xff]
    %v844 = vld [vmem:[#allocation2 + $0x100] sm:$0xff]
    %v845 = vld [vmem:[#allocation2 + $0x108] sm:$0xff]
    %v846 = vld [vmem:[#allocation2 + $0x110] sm:$0xff]
    %v847 = vld [vmem:[#allocation2 + $0x118] sm:$0xff]
    %v848 = vld [vmem:[#allocation2 + $0x120] sm:$0xff]
    %v849 = vld [vmem:[#allocation2 + $0x128] sm:$0xff]
    %v850 = vld [vmem:[#allocation2 + $0x130] sm:$0xff]
    %v851 = vld [vmem:[#allocation2 + $0x138] sm:$0xff]
    %v852 = vld [vmem:[#allocation2 + $0x140] sm:$0xff]
    %v853 = vld [vmem:[#allocation2 + $0x148] sm:$0xff]
    %v854 = vld [vmem:[#allocation2 + $0x150] sm:$0xff]
    %v855 = vld [vmem:[#allocation2 + $0x158] sm:$0xff]
    %v856 = vld [vmem:[#allocation2 + $0x160] sm:$0xff]
    %v857 = vld [vmem:[#allocation2 + $0x168] sm:$0xff]
    %v858 = vld [vmem:[#allocation2 + $0x170] sm:$0xff]
    %v859 = vld [vmem:[#allocation2 + $0x178] sm:$0xff]
    %v860 = vld [vmem:[#allocation2 + $0x180] sm:$0xff]
    %v861 = vld [vmem:[#allocation2 + $0x188] sm:$0xff]
    %v862 = vld [vmem:[#allocation2 + $0x190] sm:$0xff]
    %v863 = vld [vmem:[#allocation2 + $0x198] sm:$0xff]
    %v864 = vld [vmem:[#allocation2 + $0x1a0] sm:$0xff]
    %v865 = vld [vmem:[#allocation2 + $0x1a8] sm:$0xff]
    %v866 = vld [vmem:[#allocation2 + $0x1b0] sm:$0xff]
    %v867 = vld [vmem:[#allocation2 + $0x1b8] sm:$0xff]
    %v868 = vld [vmem:[#allocation2 + $0x1c0] sm:$0xff]
    %v869 = vld [vmem:[#allocation2 + $0x1c8] sm:$0xff]
    %v870 = vld [vmem:[#allocation2 + $0x1d0] sm:$0xff]
    %v871 = vld [vmem:[#allocation2 + $0x1d8] sm:$0xff]
    %v872 = vld [vmem:[%s3] sm:$0x7]
    %v874 = vlaneseq
    %v875 = vshrl.u32 %v874, 7
    %v876 = vsub.s32 0, %v875
    %v877 = vrot.slane %v872, %v876
    %v878 = vlaneseq
    %v879 = vshrl.u32 %v878, 7
    %v880 = vsub.s32 1, %v879
    %v881 = vrot.slane %v872, %v880
    %v882 = vlaneseq
    %v883 = vshrl.u32 %v882, 7
    %v884 = vsub.s32 2, %v883
    %v885 = vrot.slane %v872, %v884
    %v889 = vsel %vm761, %v579, 0
    %v891 = vsel %vm761, %v581, 0
    %v893 = vsel %vm761, %v584, 0
    %v895 = vsel %vm761, %v586, 0
    %v897 = vsel %vm761, %v589, 0
    %v899 = vsel %vm761, %v591, 0
    %v901 = vsel %vm761, %v594, 0
    %v903 = vsel %vm761, %v596, 0
    %v905 = vsel %vm761, %v599, 0
    %v907 = vsel %vm761, %v601, 0
    %v909 = vsel %vm761, %v604, 0
    %v911 = vsel %vm761, %v606, 0
    %v913 = vsel %vm761, %v609, 0
    %v915 = vsel %vm761, %v611, 0
    %v917 = vsel %vm761, %v614, 0
    %v919 = vsel %vm761, %v616, 0
    %921 = vmatprep.subr.mxu0 %v813
    %922 = vmatpush1.msra.mxu0 %v812
    %923 = vmatprep.subr.mxu0 %v816
    %924 = vmatpush1.msra.mxu0 %v815
    %925 = vmatprep.subr.mxu0 %v819
    %926 = vmatpush1.msra.mxu0 %v818
    %927 = vmatprep.subr.mxu0 %v822
    %928 = vmatpush1.msra.mxu0 %v821
    %929 = vmatprep.subr.mxu0 %v825
    %930 = vmatpush1.msra.mxu0 %v824
    %931 = vmatprep.subr.mxu0 %v828
    %932 = vmatpush1.msra.mxu0 %v827
    %933 = vmatprep.subr.mxu0 %v831
    %934 = vmatpush1.msra.mxu0 %v830
    %935 = vmatprep.subr.mxu0 %v834
    %936 = vmatpush1.msra.mxu0 %v833
    %937 = vmatprep.subr.mxu0 %v837
    %938 = vmatpush1.msra.mxu0 %v836
    %939 = vmatprep.subr.mxu0 %v840
    %940 = vmatpush1.msra.mxu0 %v839
    %941 = vmatprep.subr.mxu0 %v843
    %942 = vmatpush1.msra.mxu0 %v842
    %943 = vmatprep.subr.mxu0 %v846
    %944 = vmatpush1.msra.mxu0 %v845
    %945 = vmatprep.subr.mxu0 %v849
    %946 = vmatpush1.msra.mxu0 %v848
    %947 = vmatprep.subr.mxu0 %v852
    %948 = vmatpush1.msra.mxu0 %v851
    %949 = vmatprep.subr.mxu0 %v855
    %950 = vmatpush1.msra.mxu0 %v854
    %951 = vmatprep.subr.mxu0 %v858
    %952 = vmatpush1.msra.mxu0 %v857
    %953 = vmatprep.subr.mxu0 %v861
    %954 = vmatpush1.msra.mxu0 %v860
    %955 = vmatprep.subr.mxu0 %v864
    %956 = vmatpush1.msra.mxu0 %v863
    %957 = vmatprep.subr.mxu0 %v867
    %958 = vmatpush1.msra.mxu0 %v866
    %959 = vmatprep.subr.mxu0 %v870
    %960 = vmatpush1.msra.mxu0 %v869
    %961 = vmatprep.subr.mxu0 0.0
    %962 = vmatpush1.msra.mxu0 0.0
    %963 = vmatprep.subr.mxu0 0.0
    %964 = vmatpush1.msra.mxu0 0.0
    %965 = vmatprep.subr.mxu0 0.0
    %966 = vmatpush1.msra.mxu0 0.0
    %967 = vmatprep.subr.mxu0 0.0
    %968 = vmatpush1.msra.mxu0 0.0
    %969 = vmatprep.subr.mxu0 0.0
    %970 = vmatpush1.msra.mxu0 0.0
    %971 = vmatprep.subr.mxu0 0.0
    %972 = vmatpush1.msra.mxu0 0.0
    %973 = vmatprep.subr.mxu0 0.0
    %974 = vmatpush1.msra.mxu0 0.0
    %975 = vmatprep.subr.mxu0 0.0
    %976 = vmatpush1.msra.mxu0 0.0
    %977 = vmatprep.subr.mxu0 0.0
    %978 = vmatpush1.msra.mxu0 0.0
    %979 = vmatprep.subr.mxu0 0.0
    %980 = vmatpush1.msra.mxu0 0.0
    %981 = vmatprep.subr.mxu0 0.0
    %982 = vmatpush1.msra.mxu0 0.0
    %983 = vmatprep.subr.mxu0 0.0
    %984 = vmatpush1.msra.mxu0 0.0
    %985 = vmatprep.mubr.f32.mxu0 %v889
    %986 = vmatmul.mubr.f32.gmra.mrb[0].mxu0 %v796
    %v987 = vpop.f32.mrb[0].mxu0
    %v988 = vadd.f32 %v877, %v987
    %v989 = vpop.f32.mrb[0].mxu0
    %v990 = vadd.f32 %v881, %v989
    %991 = vmatprep.mubr.f32.mxu0 %v891
    %992 = vmatmul.mubr.f32.gmra.mrb[0].mxu0 %v797
    %v993 = vpop.f32.mrb[0].mxu0
    %v994 = vadd.f32 %v877, %v993
    %v995 = vpop.f32.mrb[0].mxu0
    %v996 = vadd.f32 %v881, %v995
    %997 = vmatprep.mubr.f32.mxu0 %v893
    %998 = vmatmul.mubr.f32.gmra.mrb[0].mxu0 %v798
    %v999 = vpop.f32.mrb[0].mxu0
    %v1000 = vadd.f32 %v877, %v999
    %v1001 = vpop.f32.mrb[0].mxu0
    %v1002 = vadd.f32 %v881, %v1001
    %1003 = vmatprep.mubr.f32.mxu0 %v895
    %1004 = vmatmul.mubr.f32.gmra.mrb[0].mxu0 %v799
    %v1005 = vpop.f32.mrb[0].mxu0
    %v1006 = vadd.f32 %v877, %v1005
    %v1007 = vpop.f32.mrb[0].mxu0
    %v1008 = vadd.f32 %v881, %v1007
    %1009 = vmatprep.mubr.f32.mxu0 %v897
    %1010 = vmatmul.mubr.f32.gmra.mrb[0].mxu0 %v800
    %v1011 = vpop.f32.mrb[0].mxu0
    %v1012 = vadd.f32 %v877, %v1011
    %v1013 = vpop.f32.mrb[0].mxu0
    %v1014 = vadd.f32 %v881, %v1013
    %1015 = vmatprep.mubr.f32.mxu0 %v899
    %1016 = vmatmul.mubr.f32.gmra.mrb[0].mxu0 %v801
    %v1017 = vpop.f32.mrb[0].mxu0
    %v1018 = vadd.f32 %v877, %v1017
    %v1019 = vpop.f32.mrb[0].mxu0
    %v1020 = vadd.f32 %v881, %v1019
    %1021 = vmatprep.mubr.f32.mxu0 %v901
    %1022 = vmatmul.mubr.f32.gmra.mrb[0].mxu0 %v802
    %v1023 = vpop.f32.mrb[0].mxu0
    %v1024 = vadd.f32 %v877, %v1023
    %v1025 = vpop.f32.mrb[0].mxu0
    %v1026 = vadd.f32 %v881, %v1025
    %1027 = vmatprep.mubr.f32.mxu0 %v903
    %1028 = vmatmul.mubr.f32.gmra.mrb[0].mxu0 %v803
    %v1029 = vpop.f32.mrb[0].mxu0
    %v1030 = vadd.f32 %v877, %v1029
    %v1031 = vpop.f32.mrb[0].mxu0
    %v1032 = vadd.f32 %v881, %v1031
    %1033 = vmatprep.mubr.f32.mxu0 %v905
    %1034 = vmatmul.mubr.f32.gmra.mrb[0].mxu0 %v804
    %v1035 = vpop.f32.mrb[0].mxu0
    %v1036 = vadd.f32 %v877, %v1035
    %v1037 = vpop.f32.mrb[0].mxu0
    %v1038 = vadd.f32 %v881, %v1037
    %1039 = vmatprep.mubr.f32.mxu0 %v907
    %1040 = vmatmul.mubr.f32.gmra.mrb[0].mxu0 %v805
    %v1041 = vpop.f32.mrb[0].mxu0
    %v1042 = vadd.f32 %v877, %v1041
    %v1043 = vpop.f32.mrb[0].mxu0
    %v1044 = vadd.f32 %v881, %v1043
    %1045 = vmatprep.mubr.f32.mxu0 %v909
    %1046 = vmatmul.mubr.f32.gmra.mrb[0].mxu0 %v806
    %v1047 = vpop.f32.mrb[0].mxu0
    %v1048 = vadd.f32 %v877, %v1047
    %v1049 = vpop.f32.mrb[0].mxu0
    %v1050 = vadd.f32 %v881, %v1049
    %1051 = vmatprep.mubr.f32.mxu0 %v911
    %1052 = vmatmul.mubr.f32.gmra.mrb[0].mxu0 %v807
    %v1053 = vpop.f32.mrb[0].mxu0
    %v1054 = vadd.f32 %v877, %v1053
    %v1055 = vpop.f32.mrb[0].mxu0
    %v1056 = vadd.f32 %v881, %v1055
    %1057 = vmatprep.mubr.f32.mxu0 %v913
    %1058 = vmatmul.mubr.f32.gmra.mrb[0].mxu0 %v808
    %v1059 = vpop.f32.mrb[0].mxu0
    %v1060 = vadd.f32 %v877, %v1059
    %v1061 = vpop.f32.mrb[0].mxu0
    %v1062 = vadd.f32 %v881, %v1061
    %1063 = vmatprep.mubr.f32.mxu0 %v915
    %1064 = vmatmul.mubr.f32.gmra.mrb[0].mxu0 %v809
    %v1065 = vpop.f32.mrb[0].mxu0
    %v1066 = vadd.f32 %v877, %v1065
    %v1067 = vpop.f32.mrb[0].mxu0
    %v1068 = vadd.f32 %v881, %v1067
    %1069 = vmatprep.mubr.f32.mxu0 %v917
    %1070 = vmatmul.mubr.f32.gmra.mrb[0].mxu0 %v810
    %v1071 = vpop.f32.mrb[0].mxu0
    %v1072 = vadd.f32 %v877, %v1071
    %v1073 = vpop.f32.mrb[0].mxu0
    %v1074 = vadd.f32 %v881, %v1073
    %1075 = vmatprep.mubr.f32.mxu0 %v919
    %1076 = vmatmul.mubr.f32.gmra.mrb[0].mxu0 %v811
    %v1077 = vpop.f32.mrb[0].mxu0
    %v1078 = vadd.f32 %v877, %v1077
    %v1079 = vpop.f32.mrb[0].mxu0
    %v1080 = vadd.f32 %v881, %v1079
    %1081 = vdwg.mxu0
    %1082 = vmatprep.subr.mxu0 0.0
    %1083 = vmatpush1.msra.mxu0 %v814
    %1084 = vmatprep.subr.mxu0 0.0
    %1085 = vmatpush1.msra.mxu0 %v817
    %1086 = vmatprep.subr.mxu0 0.0
    %1087 = vmatpush1.msra.mxu0 %v820
    %1088 = vmatprep.subr.mxu0 0.0
    %1089 = vmatpush1.msra.mxu0 %v823
    %1090 = vmatprep.subr.mxu0 0.0
    %1091 = vmatpush1.msra.mxu0 %v826
    %1092 = vmatprep.subr.mxu0 0.0
    %1093 = vmatpush1.msra.mxu0 %v829
    %1094 = vmatprep.subr.mxu0 0.0
    %1095 = vmatpush1.msra.mxu0 %v832
    %1096 = vmatprep.subr.mxu0 0.0
    %1097 = vmatpush1.msra.mxu0 %v835
    %1098 = vmatprep.subr.mxu0 0.0
    %1099 = vmatpush1.msra.mxu0 %v838
    %1100 = vmatprep.subr.mxu0 0.0
    %1101 = vmatpush1.msra.mxu0 %v841
    %1102 = vmatprep.subr.mxu0 0.0
    %1103 = vmatpush1.msra.mxu0 %v844
    %1104 = vmatprep.subr.mxu0 0.0
    %1105 = vmatpush1.msra.mxu0 %v847
    %1106 = vmatprep.subr.mxu0 0.0
    %1107 = vmatpush1.msra.mxu0 %v850
    %1108 = vmatprep.subr.mxu0 0.0
    %1109 = vmatpush1.msra.mxu0 %v853
    %1110 = vmatprep.subr.mxu0 0.0
    %1111 = vmatpush1.msra.mxu0 %v856
    %1112 = vmatprep.subr.mxu0 0.0
    %1113 = vmatpush1.msra.mxu0 %v859
    %1114 = vmatprep.subr.mxu0 0.0
    %1115 = vmatpush1.msra.mxu0 %v862
    %1116 = vmatprep.subr.mxu0 0.0
    %1117 = vmatpush1.msra.mxu0 %v865
    %1118 = vmatprep.subr.mxu0 0.0
    %1119 = vmatpush1.msra.mxu0 %v868
    %1120 = vmatprep.subr.mxu0 0.0
    %1121 = vmatpush1.msra.mxu0 %v871
    %1122 = vmatprep.subr.mxu0 0.0
    %1123 = vmatpush1.msra.mxu0 0.0
    %1124 = vmatprep.subr.mxu0 0.0
    %1125 = vmatpush1.msra.mxu0 0.0
    %1126 = vmatprep.subr.mxu0 0.0
    %1127 = vmatpush1.msra.mxu0 0.0
    %1128 = vmatprep.subr.mxu0 0.0
    %1129 = vmatpush1.msra.mxu0 0.0
    %1130 = vmatprep.subr.mxu0 0.0
    %1131 = vmatpush1.msra.mxu0 0.0
    %1132 = vmatprep.subr.mxu0 0.0
    %1133 = vmatpush1.msra.mxu0 0.0
    %1134 = vmatprep.subr.mxu0 0.0
    %1135 = vmatpush1.msra.mxu0 0.0
    %1136 = vmatprep.subr.mxu0 0.0
    %1137 = vmatpush1.msra.mxu0 0.0
    %1138 = vmatprep.subr.mxu0 0.0
    %1139 = vmatpush1.msra.mxu0 0.0
    %1140 = vmatprep.subr.mxu0 0.0
    %1141 = vmatpush1.msra.mxu0 0.0
    %1142 = vmatprep.subr.mxu0 0.0
    %1143 = vmatpush1.msra.mxu0 0.0
    %1144 = vmatprep.subr.mxu0 0.0
    %1145 = vmatpush1.msra.mxu0 0.0
    %1146 = vmatprep.mubr.f32.mxu0 %v889
    %1147 = vmatmul.mubr.f32.gmra.mrb[0].mxu0 %v796
    %v1148 = vpop.f32.mrb[0].mxu0
    %v1149 = vadd.f32 %v885, %v1148
    %v1150 = vpop.f32.mrb[0].mxu0
    %1151 = vmatprep.mubr.f32.mxu0 %v891
    %1152 = vmatmul.mubr.f32.gmra.mrb[0].mxu0 %v797
    %v1153 = vpop.f32.mrb[0].mxu0
    %v1154 = vpop.f32.mrb[0].mxu0
    %1155 = vmatprep.mubr.f32.mxu0 %v893
    %1156 = vmatmul.mubr.f32.gmra.mrb[0].mxu0 %v798
    %v1157 = vpop.f32.mrb[0].mxu0
    %v1158 = vadd.f32 %v885, %v1157
    %v1159 = vpop.f32.mrb[0].mxu0
    %1160 = vmatprep.mubr.f32.mxu0 %v895
    %1161 = vmatmul.mubr.f32.gmra.mrb[0].mxu0 %v799
    %v1162 = vpop.f32.mrb[0].mxu0
    %v1163 = vpop.f32.mrb[0].mxu0
    %1164 = vmatprep.mubr.f32.mxu0 %v897
    %1165 = vmatmul.mubr.f32.gmra.mrb[0].mxu0 %v800
    %v1166 = vpop.f32.mrb[0].mxu0
    %v1167 = vadd.f32 %v885, %v1166
    %v1168 = vpop.f32.mrb[0].mxu0
    %1169 = vmatprep.mubr.f32.mxu0 %v899
    %1170 = vmatmul.mubr.f32.gmra.mrb[0].mxu0 %v801
    %v1171 = vpop.f32.mrb[0].mxu0
    %v1172 = vpop.f32.mrb[0].mxu0
    %1173 = vmatprep.mubr.f32.mxu0 %v901
    %1174 = vmatmul.mubr.f32.gmra.mrb[0].mxu0 %v802
    %v1175 = vpop.f32.mrb[0].mxu0
    %v1176 = vadd.f32 %v885, %v1175
    %v1177 = vpop.f32.mrb[0].mxu0
    %1178 = vmatprep.mubr.f32.mxu0 %v903
    %1179 = vmatmul.mubr.f32.gmra.mrb[0].mxu0 %v803
    %v1180 = vpop.f32.mrb[0].mxu0
    %v1181 = vpop.f32.mrb[0].mxu0
    %1182 = vmatprep.mubr.f32.mxu0 %v905
    %1183 = vmatmul.mubr.f32.gmra.mrb[0].mxu0 %v804
    %v1184 = vpop.f32.mrb[0].mxu0
    %v1185 = vadd.f32 %v885, %v1184
    %v1186 = vpop.f32.mrb[0].mxu0
    %1187 = vmatprep.mubr.f32.mxu0 %v907
    %1188 = vmatmul.mubr.f32.gmra.mrb[0].mxu0 %v805
    %v1189 = vpop.f32.mrb[0].mxu0
    %v1190 = vpop.f32.mrb[0].mxu0
    %1191 = vmatprep.mubr.f32.mxu0 %v909
    %1192 = vmatmul.mubr.f32.gmra.mrb[0].mxu0 %v806
    %v1193 = vpop.f32.mrb[0].mxu0
    %v1194 = vadd.f32 %v885, %v1193
    %v1195 = vpop.f32.mrb[0].mxu0
    %1196 = vmatprep.mubr.f32.mxu0 %v911
    %1197 = vmatmul.mubr.f32.gmra.mrb[0].mxu0 %v807
    %v1198 = vpop.f32.mrb[0].mxu0
    %v1199 = vpop.f32.mrb[0].mxu0
    %1200 = vmatprep.mubr.f32.mxu0 %v913
    %1201 = vmatmul.mubr.f32.gmra.mrb[0].mxu0 %v808
    %v1202 = vpop.f32.mrb[0].mxu0
    %v1203 = vadd.f32 %v885, %v1202
    %v1204 = vpop.f32.mrb[0].mxu0
    %1205 = vmatprep.mubr.f32.mxu0 %v915
    %1206 = vmatmul.mubr.f32.gmra.mrb[0].mxu0 %v809
    %v1207 = vpop.f32.mrb[0].mxu0
    %v1208 = vpop.f32.mrb[0].mxu0
    %1209 = vmatprep.mubr.f32.mxu0 %v917
    %1210 = vmatmul.mubr.f32.gmra.mrb[0].mxu0 %v810
    %v1211 = vpop.f32.mrb[0].mxu0
    %v1212 = vadd.f32 %v885, %v1211
    %v1213 = vpop.f32.mrb[0].mxu0
    %1214 = vmatprep.mubr.f32.mxu0 %v919
    %1215 = vmatmul.mubr.f32.gmra.mrb[0].mxu0 %v811
    %v1216 = vpop.f32.mrb[0].mxu0
    %v1217 = vpop.f32.mrb[0].mxu0
    %1218 = vdwg.mxu0
    %v1219 = vmax.f32 %v988, 0.0
    %v1220 = vmax.f32 %v990, 0.0
    %v1221 = vmax.f32 %v1149, 0.0
    %v1222 = vmax.f32 %v994, 0.0
    %v1223 = vmax.f32 %v996, 0.0
    %v1224 = vmax.f32 %v1000, 0.0
    %v1225 = vmax.f32 %v1002, 0.0
    %v1226 = vmax.f32 %v1158, 0.0
    %v1227 = vmax.f32 %v1006, 0.0
    %v1228 = vmax.f32 %v1008, 0.0
    %v1229 = vmax.f32 %v1012, 0.0
    %v1230 = vmax.f32 %v1014, 0.0
    %v1231 = vmax.f32 %v1167, 0.0
    %v1232 = vmax.f32 %v1018, 0.0
    %v1233 = vmax.f32 %v1020, 0.0
    %v1234 = vmax.f32 %v1024, 0.0
    %v1235 = vmax.f32 %v1026, 0.0
    %v1236 = vmax.f32 %v1176, 0.0
    %v1237 = vmax.f32 %v1030, 0.0
    %v1238 = vmax.f32 %v1032, 0.0
    %v1239 = vmax.f32 %v1036, 0.0
    %v1240 = vmax.f32 %v1038, 0.0
    %v1241 = vmax.f32 %v1185, 0.0
    %v1242 = vmax.f32 %v1042, 0.0
    %v1243 = vmax.f32 %v1044, 0.0
    %v1244 = vmax.f32 %v1048, 0.0
    %v1245 = vmax.f32 %v1050, 0.0
    %v1246 = vmax.f32 %v1194, 0.0
    %v1247 = vmax.f32 %v1054, 0.0
    %v1248 = vmax.f32 %v1056, 0.0
    %v1249 = vmax.f32 %v1060, 0.0
    %v1250 = vmax.f32 %v1062, 0.0
    %v1251 = vmax.f32 %v1203, 0.0
    %v1252 = vmax.f32 %v1066, 0.0
    %v1253 = vmax.f32 %v1068, 0.0
    %v1254 = vmax.f32 %v1072, 0.0
    %v1255 = vmax.f32 %v1074, 0.0
    %v1256 = vmax.f32 %v1212, 0.0
    %v1257 = vmax.f32 %v1078, 0.0
    %v1258 = vmax.f32 %v1080, 0.0
    %v1259 = vsel %vm576, %v1222, -inf
    %v1260 = vmax.f32 %v1219, %v1259
    %v1261 = vrot.slane %v1260, 4
    %v1262 = vmax.f32 %v1260, %v1261
    %v1263 = vrot.slane %v1262, 2
    %v1264 = vmax.f32 %v1262, %v1263
    %v1265 = vrot.slane %v1264, 1
    %v1266 = vmax.f32 %v1264, %v1265
    %v1267 = vsel %vm576, %v1227, -inf
    %v1268 = vmax.f32 %v1224, %v1267
    %v1269 = vrot.slane %v1268, 4
    %v1270 = vmax.f32 %v1268, %v1269
    %v1271 = vrot.slane %v1270, 2
    %v1272 = vmax.f32 %v1270, %v1271
    %v1273 = vrot.slane %v1272, 1
    %v1274 = vmax.f32 %v1272, %v1273
    %v1275 = vsel %vm576, %v1232, -inf
    %v1276 = vmax.f32 %v1229, %v1275
    %v1277 = vrot.slane %v1276, 4
    %v1278 = vmax.f32 %v1276, %v1277
    %v1279 = vrot.slane %v1278, 2
    %v1280 = vmax.f32 %v1278, %v1279
    %v1281 = vrot.slane %v1280, 1
    %v1282 = vmax.f32 %v1280, %v1281
    %v1283 = vsel %vm576, %v1237, -inf
    %v1284 = vmax.f32 %v1234, %v1283
    %v1285 = vrot.slane %v1284, 4
    %v1286 = vmax.f32 %v1284, %v1285
    %v1287 = vrot.slane %v1286, 2
    %v1288 = vmax.f32 %v1286, %v1287
    %v1289 = vrot.slane %v1288, 1
    %v1290 = vmax.f32 %v1288, %v1289
    %v1291 = vsel %vm576, %v1242, -inf
    %v1292 = vmax.f32 %v1239, %v1291
    %v1293 = vrot.slane %v1292, 4
    %v1294 = vmax.f32 %v1292, %v1293
    %v1295 = vrot.slane %v1294, 2
    %v1296 = vmax.f32 %v1294, %v1295
    %v1297 = vrot.slane %v1296, 1
    %v1298 = vmax.f32 %v1296, %v1297
    %v1299 = vsel %vm576, %v1247, -inf
    %v1300 = vmax.f32 %v1244, %v1299
    %v1301 = vrot.slane %v1300, 4
    %v1302 = vmax.f32 %v1300, %v1301
    %v1303 = vrot.slane %v1302, 2
    %v1304 = vmax.f32 %v1302, %v1303
    %v1305 = vrot.slane %v1304, 1
    %v1306 = vmax.f32 %v1304, %v1305
    %v1307 = vsel %vm576, %v1252, -inf
    %v1308 = vmax.f32 %v1249, %v1307
    %v1309 = vrot.slane %v1308, 4
    %v1310 = vmax.f32 %v1308, %v1309
    %v1311 = vrot.slane %v1310, 2
    %v1312 = vmax.f32 %v1310, %v1311
    %v1313 = vrot.slane %v1312, 1
    %v1314 = vmax.f32 %v1312, %v1313
    %v1315 = vsel %vm576, %v1257, -inf
    %v1316 = vmax.f32 %v1254, %v1315
    %v1317 = vrot.slane %v1316, 4
    %v1318 = vmax.f32 %v1316, %v1317
    %v1319 = vrot.slane %v1318, 2
    %v1320 = vmax.f32 %v1318, %v1319
    %v1321 = vrot.slane %v1320, 1
    %v1322 = vmax.f32 %v1320, %v1321
    %vm1323 = vcmask 1041408
    %v1324 = vsel %vm1323, %v1223, -inf
    %v1325 = vmax.f32 %v1220, %v1324
    %v1326 = vrot.slane %v1325, 4
    %v1327 = vmax.f32 %v1325, %v1326
    %v1328 = vrot.slane %v1327, 2
    %v1329 = vmax.f32 %v1327, %v1328
    %v1330 = vrot.slane %v1329, 1
    %v1331 = vmax.f32 %v1329, %v1330
    %v1332 = vsel %vm1323, %v1228, -inf
    %v1333 = vmax.f32 %v1225, %v1332
    %v1334 = vrot.slane %v1333, 4
    %v1335 = vmax.f32 %v1333, %v1334
    %v1336 = vrot.slane %v1335, 2
    %v1337 = vmax.f32 %v1335, %v1336
    %v1338 = vrot.slane %v1337, 1
    %v1339 = vmax.f32 %v1337, %v1338
    %v1340 = vsel %vm1323, %v1233, -inf
    %v1341 = vmax.f32 %v1230, %v1340
    %v1342 = vrot.slane %v1341, 4
    %v1343 = vmax.f32 %v1341, %v1342
    %v1344 = vrot.slane %v1343, 2
    %v1345 = vmax.f32 %v1343, %v1344
    %v1346 = vrot.slane %v1345, 1
    %v1347 = vmax.f32 %v1345, %v1346
    %v1348 = vsel %vm1323, %v1238, -inf
    %v1349 = vmax.f32 %v1235, %v1348
    %v1350 = vrot.slane %v1349, 4
    %v1351 = vmax.f32 %v1349, %v1350
    %v1352 = vrot.slane %v1351, 2
    %v1353 = vmax.f32 %v1351, %v1352
    %v1354 = vrot.slane %v1353, 1
    %v1355 = vmax.f32 %v1353, %v1354
    %v1356 = vsel %vm1323, %v1243, -inf
    %v1357 = vmax.f32 %v1240, %v1356
    %v1358 = vrot.slane %v1357, 4
    %v1359 = vmax.f32 %v1357, %v1358
    %v1360 = vrot.slane %v1359, 2
    %v1361 = vmax.f32 %v1359, %v1360
    %v1362 = vrot.slane %v1361, 1
    %v1363 = vmax.f32 %v1361, %v1362
    %v1364 = vsel %vm1323, %v1248, -inf
    %v1365 = vmax.f32 %v1245, %v1364
    %v1366 = vrot.slane %v1365, 4
    %v1367 = vmax.f32 %v1365, %v1366
    %v1368 = vrot.slane %v1367, 2
    %v1369 = vmax.f32 %v1367, %v1368
    %v1370 = vrot.slane %v1369, 1
    %v1371 = vmax.f32 %v1369, %v1370
    %v1372 = vsel %vm1323, %v1253, -inf
    %v1373 = vmax.f32 %v1250, %v1372
    %v1374 = vrot.slane %v1373, 4
    %v1375 = vmax.f32 %v1373, %v1374
    %v1376 = vrot.slane %v1375, 2
    %v1377 = vmax.f32 %v1375, %v1376
    %v1378 = vrot.slane %v1377, 1
    %v1379 = vmax.f32 %v1377, %v1378
    %v1380 = vsel %vm1323, %v1258, -inf
    %v1381 = vmax.f32 %v1255, %v1380
    %v1382 = vrot.slane %v1381, 4
    %v1383 = vmax.f32 %v1381, %v1382
    %v1384 = vrot.slane %v1383, 2
    %v1385 = vmax.f32 %v1383, %v1384
    %v1386 = vrot.slane %v1385, 1
    %v1387 = vmax.f32 %v1385, %v1386
    %v1388 = vrot.slane %v1221, 4
    %v1389 = vmax.f32 %v1221, %v1388
    %v1390 = vrot.slane %v1389, 2
    %v1391 = vmax.f32 %v1389, %v1390
    %v1392 = vrot.slane %v1391, 1
    %v1393 = vmax.f32 %v1391, %v1392
    %v1394 = vrot.slane %v1226, 4
    %v1395 = vmax.f32 %v1226, %v1394
    %v1396 = vrot.slane %v1395, 2
    %v1397 = vmax.f32 %v1395, %v1396
    %v1398 = vrot.slane %v1397, 1
    %v1399 = vmax.f32 %v1397, %v1398
    %v1400 = vrot.slane %v1231, 4
    %v1401 = vmax.f32 %v1231, %v1400
    %v1402 = vrot.slane %v1401, 2
    %v1403 = vmax.f32 %v1401, %v1402
    %v1404 = vrot.slane %v1403, 1
    %v1405 = vmax.f32 %v1403, %v1404
    %v1406 = vrot.slane %v1236, 4
    %v1407 = vmax.f32 %v1236, %v1406
    %v1408 = vrot.slane %v1407, 2
    %v1409 = vmax.f32 %v1407, %v1408
    %v1410 = vrot.slane %v1409, 1
    %v1411 = vmax.f32 %v1409, %v1410
    %v1412 = vrot.slane %v1241, 4
    %v1413 = vmax.f32 %v1241, %v1412
    %v1414 = vrot.slane %v1413, 2
    %v1415 = vmax.f32 %v1413, %v1414
    %v1416 = vrot.slane %v1415, 1
    %v1417 = vmax.f32 %v1415, %v1416
    %v1418 = vrot.slane %v1246, 4
    %v1419 = vmax.f32 %v1246, %v1418
    %v1420 = vrot.slane %v1419, 2
    %v1421 = vmax.f32 %v1419, %v1420
    %v1422 = vrot.slane %v1421, 1
    %v1423 = vmax.f32 %v1421, %v1422
    %v1424 = vrot.slane %v1251, 4
    %v1425 = vmax.f32 %v1251, %v1424
    %v1426 = vrot.slane %v1425, 2
    %v1427 = vmax.f32 %v1425, %v1426
    %v1428 = vrot.slane %v1427, 1
    %v1429 = vmax.f32 %v1427, %v1428
    %v1430 = vrot.slane %v1256, 4
    %v1431 = vmax.f32 %v1256, %v1430
    %v1432 = vrot.slane %v1431, 2
    %v1433 = vmax.f32 %v1431, %v1432
    %v1434 = vrot.slane %v1433, 1
    %v1435 = vmax.f32 %v1433, %v1434
    %vm1444 = vcmask 1041409
    %v1445 = vsel %vm1444, %v1274, %v1266
    %vm1446 = vcmask 1042434
    %v1447 = vsel %vm1446, %v1282, %v1445
    %vm1448 = vcmask 1043459
    %v1449 = vsel %vm1448, %v1290, %v1447
    %vm1450 = vcmask 1044484
    %v1451 = vsel %vm1450, %v1298, %v1449
    %vm1452 = vcmask 1045509
    %v1453 = vsel %vm1452, %v1306, %v1451
    %vm1454 = vcmask 1046534
    %v1455 = vsel %vm1454, %v1314, %v1453
    %vm1456 = vcmask 1047559
    %v1457 = vsel %vm1456, %v1322, %v1455
    %v1467 = vsel %vm1444, %v1339, %v1331
    %v1468 = vsel %vm1446, %v1347, %v1467
    %v1469 = vsel %vm1448, %v1355, %v1468
    %v1470 = vsel %vm1450, %v1363, %v1469
    %v1471 = vsel %vm1452, %v1371, %v1470
    %v1472 = vsel %vm1454, %v1379, %v1471
    %v1473 = vsel %vm1456, %v1387, %v1472
    %v1483 = vsel %vm1444, %v1399, %v1393
    %v1484 = vsel %vm1446, %v1405, %v1483
    %v1485 = vsel %vm1448, %v1411, %v1484
    %v1486 = vsel %vm1450, %v1417, %v1485
    %v1487 = vsel %vm1452, %v1423, %v1486
    %v1488 = vsel %vm1454, %v1429, %v1487
    %v1489 = vsel %vm1456, %v1435, %v1488
    %v1491 = vld [vmem:[#allocation5] sm:$0xff]
    %v1492 = vld [vmem:[#allocation5 + $0x8] sm:$0xff]
    %v1493 = vld [vmem:[#allocation5 + $0x10] sm:$0xff]
    %v1494 = vld [vmem:[#allocation5 + $0x18] sm:$0xff]
    %v1495 = vld [vmem:[#allocation5 + $0x20] sm:$0xff]
    %v1496 = vld [vmem:[#allocation5 + $0x28] sm:$0xff]
    %v1497 = vld [vmem:[#allocation5 + $0x30] sm:$0xff]
    %v1498 = vld [vmem:[#allocation5 + $0x38] sm:$0xff]
    %v1499 = vld [vmem:[#allocation5 + $0x40] sm:$0xff]
    %v1500 = vld [vmem:[#allocation5 + $0x48] sm:$0xff]
    %v1501 = vld [vmem:[#allocation5 + $0x50] sm:$0xff]
    %v1502 = vld [vmem:[#allocation5 + $0x58] sm:$0xff]
    %v1503 = vld [vmem:[#allocation5 + $0x60] sm:$0xff]
    %v1504 = vld [vmem:[#allocation5 + $0x68] sm:$0xff]
    %v1505 = vld [vmem:[#allocation5 + $0x70] sm:$0xff]
    %v1506 = vld [vmem:[#allocation5 + $0x78] sm:$0xff]
    %v1507 = vld [vmem:[#allocation5 + $0x80] sm:$0xff]
    %v1508 = vld [vmem:[#allocation5 + $0x88] sm:$0xff]
    %v1509 = vld [vmem:[#allocation5 + $0x90] sm:$0xff]
    %v1510 = vld [vmem:[#allocation5 + $0x98] sm:$0xff]
    %v1511 = vld [vmem:[#allocation5 + $0xa0] sm:$0xff]
    %v1512 = vld [vmem:[#allocation5 + $0xa8] sm:$0xff]
    %v1513 = vld [vmem:[#allocation5 + $0xb0] sm:$0xff]
    %v1514 = vld [vmem:[#allocation5 + $0xb8] sm:$0xff]
    %v1515 = vld [vmem:[#allocation5 + $0xc0] sm:$0xff]
    %v1516 = vld [vmem:[#allocation5 + $0xc8] sm:$0xff]
    %v1517 = vld [vmem:[#allocation5 + $0xd0] sm:$0xff]
    %v1518 = vld [vmem:[#allocation5 + $0xd8] sm:$0xff]
    %v1519 = vld [vmem:[#allocation5 + $0xe0] sm:$0xff]
    %v1520 = vld [vmem:[#allocation5 + $0xe8] sm:$0xff]
    %v1521 = vld [vmem:[#allocation5 + $0xf0] sm:$0xff]
    %v1522 = vld [vmem:[#allocation5 + $0xf8] sm:$0xff]
    %v1523 = vld [vmem:[#allocation5 + $0x100] sm:$0xff]
    %v1524 = vld [vmem:[#allocation5 + $0x108] sm:$0xff]
    %v1525 = vld [vmem:[#allocation5 + $0x110] sm:$0xff]
    %v1526 = vld [vmem:[#allocation5 + $0x118] sm:$0xff]
    %v1527 = vld [vmem:[#allocation5 + $0x120] sm:$0xff]
    %v1528 = vld [vmem:[#allocation5 + $0x128] sm:$0xff]
    %v1529 = vld [vmem:[#allocation5 + $0x130] sm:$0xff]
    %v1530 = vld [vmem:[#allocation5 + $0x138] sm:$0xff]
    %v1531 = vld [vmem:[#allocation5 + $0x140] sm:$0xff]
    %v1532 = vld [vmem:[#allocation5 + $0x148] sm:$0xff]
    %v1533 = vld [vmem:[#allocation5 + $0x150] sm:$0xff]
    %v1534 = vld [vmem:[#allocation5 + $0x158] sm:$0xff]
    %v1535 = vld [vmem:[#allocation5 + $0x160] sm:$0xff]
    %v1536 = vld [vmem:[#allocation5 + $0x168] sm:$0xff]
    %v1537 = vld [vmem:[#allocation5 + $0x170] sm:$0xff]
    %v1538 = vld [vmem:[#allocation5 + $0x178] sm:$0xff]
    %v1539 = vld [vmem:[%s5] sm:$0x1]
    %v1541 = vlaneseq
    %v1542 = vshrl.u32 %v1541, 7
    %v1543 = vsub.s32 0, %v1542
    %v1544 = vrot.slane %v1539, %v1543
    %1546 = vmatprep.subr.mxu0 0.0
    %1547 = vmatpush1.msra.mxu0 %v1491
    %1548 = vmatprep.subr.mxu0 0.0
    %1549 = vmatpush1.msra.mxu0 %v1492
    %1550 = vmatprep.subr.mxu0 0.0
    %1551 = vmatpush1.msra.mxu0 %v1493
    %1552 = vmatprep.subr.mxu0 0.0
    %1553 = vmatpush1.msra.mxu0 %v1494
    %1554 = vmatprep.subr.mxu0 0.0
    %1555 = vmatpush1.msra.mxu0 %v1495
    %1556 = vmatprep.subr.mxu0 0.0
    %1557 = vmatpush1.msra.mxu0 %v1496
    %1558 = vmatprep.subr.mxu0 0.0
    %1559 = vmatpush1.msra.mxu0 %v1497
    %1560 = vmatprep.subr.mxu0 0.0
    %1561 = vmatpush1.msra.mxu0 %v1498
    %1562 = vmatprep.subr.mxu0 0.0
    %1563 = vmatpush1.msra.mxu0 %v1499
    %1564 = vmatprep.subr.mxu0 0.0
    %1565 = vmatpush1.msra.mxu0 %v1500
    %1566 = vmatprep.subr.mxu0 0.0
    %1567 = vmatpush1.msra.mxu0 %v1501
    %1568 = vmatprep.subr.mxu0 0.0
    %1569 = vmatpush1.msra.mxu0 %v1502
    %1570 = vmatprep.subr.mxu0 0.0
    %1571 = vmatpush1.msra.mxu0 %v1503
    %1572 = vmatprep.subr.mxu0 0.0
    %1573 = vmatpush1.msra.mxu0 %v1504
    %1574 = vmatprep.subr.mxu0 0.0
    %1575 = vmatpush1.msra.mxu0 %v1505
    %1576 = vmatprep.subr.mxu0 0.0
    %1577 = vmatpush1.msra.mxu0 %v1506
    %1578 = vmatprep.subr.mxu0 0.0
    %1579 = vmatpush1.msra.mxu0 %v1507
    %1580 = vmatprep.subr.mxu0 0.0
    %1581 = vmatpush1.msra.mxu0 %v1508
    %1582 = vmatprep.subr.mxu0 0.0
    %1583 = vmatpush1.msra.mxu0 %v1509
    %1584 = vmatprep.subr.mxu0 0.0
    %1585 = vmatpush1.msra.mxu0 %v1510
    %1586 = vmatprep.subr.mxu0 0.0
    %1587 = vmatpush1.msra.mxu0 %v1511
    %1588 = vmatprep.subr.mxu0 0.0
    %1589 = vmatpush1.msra.mxu0 %v1512
    %1590 = vmatprep.subr.mxu0 0.0
    %1591 = vmatpush1.msra.mxu0 %v1513
    %1592 = vmatprep.subr.mxu0 0.0
    %1593 = vmatpush1.msra.mxu0 %v1514
    %1594 = vmatprep.subr.mxu0 0.0
    %1595 = vmatpush1.msra.mxu0 %v1515
    %1596 = vmatprep.subr.mxu0 0.0
    %1597 = vmatpush1.msra.mxu0 %v1516
    %1598 = vmatprep.subr.mxu0 0.0
    %1599 = vmatpush1.msra.mxu0 %v1517
    %1600 = vmatprep.subr.mxu0 0.0
    %1601 = vmatpush1.msra.mxu0 %v1518
    %1602 = vmatprep.subr.mxu0 0.0
    %1603 = vmatpush1.msra.mxu0 %v1519
    %1604 = vmatprep.subr.mxu0 0.0
    %1605 = vmatpush1.msra.mxu0 %v1520
    %1606 = vmatprep.subr.mxu0 0.0
    %1607 = vmatpush1.msra.mxu0 %v1521
    %1608 = vmatprep.subr.mxu0 0.0
    %1609 = vmatpush1.msra.mxu0 %v1522
    %1610 = vmatprep.mubr.f32.mxu0 %v1473
    %1611 = vmatmul.mubr.f32.gmra.mrb[0].mxu0 %v1457
    %v1612 = vpop.f32.mrb[0].mxu0
    %v1613 = vadd.f32 %v1544, %v1612
    %v1614 = vpop.f32.mrb[0].mxu0
    %1615 = vdwg.mxu0
    %1616 = vmatprep.subr.mxu0 0.0
    %1617 = vmatpush1.msra.mxu0 %v1523
    %1618 = vmatprep.subr.mxu0 0.0
    %1619 = vmatpush1.msra.mxu0 %v1524
    %1620 = vmatprep.subr.mxu0 0.0
    %1621 = vmatpush1.msra.mxu0 %v1525
    %1622 = vmatprep.subr.mxu0 0.0
    %1623 = vmatpush1.msra.mxu0 %v1526
    %1624 = vmatprep.subr.mxu0 0.0
    %1625 = vmatpush1.msra.mxu0 %v1527
    %1626 = vmatprep.subr.mxu0 0.0
    %1627 = vmatpush1.msra.mxu0 %v1528
    %1628 = vmatprep.subr.mxu0 0.0
    %1629 = vmatpush1.msra.mxu0 %v1529
    %1630 = vmatprep.subr.mxu0 0.0
    %1631 = vmatpush1.msra.mxu0 %v1530
    %1632 = vmatprep.subr.mxu0 0.0
    %1633 = vmatpush1.msra.mxu0 %v1531
    %1634 = vmatprep.subr.mxu0 0.0
    %1635 = vmatpush1.msra.mxu0 %v1532
    %1636 = vmatprep.subr.mxu0 0.0
    %1637 = vmatpush1.msra.mxu0 %v1533
    %1638 = vmatprep.subr.mxu0 0.0
    %1639 = vmatpush1.msra.mxu0 %v1534
    %1640 = vmatprep.subr.mxu0 0.0
    %1641 = vmatpush1.msra.mxu0 %v1535
    %1642 = vmatprep.subr.mxu0 0.0
    %1643 = vmatpush1.msra.mxu0 %v1536
    %1644 = vmatprep.subr.mxu0 0.0
    %1645 = vmatpush1.msra.mxu0 %v1537
    %1646 = vmatprep.subr.mxu0 0.0
    %1647 = vmatpush1.msra.mxu0 %v1538
    %1648 = vmatprep.subr.mxu0 0.0
    %1649 = vmatpush1.msra.mxu0 0.0
    %1650 = vmatprep.subr.mxu0 0.0
    %1651 = vmatpush1.msra.mxu0 0.0
    %1652 = vmatprep.subr.mxu0 0.0
    %1653 = vmatpush1.msra.mxu0 0.0
    %1654 = vmatprep.subr.mxu0 0.0
    %1655 = vmatpush1.msra.mxu0 0.0
    %1656 = vmatprep.subr.mxu0 0.0
    %1657 = vmatpush1.msra.mxu0 0.0
    %1658 = vmatprep.subr.mxu0 0.0
    %1659 = vmatpush1.msra.mxu0 0.0
    %1660 = vmatprep.subr.mxu0 0.0
    %1661 = vmatpush1.msra.mxu0 0.0
    %1662 = vmatprep.subr.mxu0 0.0
    %1663 = vmatpush1.msra.mxu0 0.0
    %1664 = vmatprep.subr.mxu0 0.0
    %1665 = vmatpush1.msra.mxu0 0.0
    %1666 = vmatprep.subr.mxu0 0.0
    %1667 = vmatpush1.msra.mxu0 0.0
    %1668 = vmatprep.subr.mxu0 0.0
    %1669 = vmatpush1.msra.mxu0 0.0
    %1670 = vmatprep.subr.mxu0 0.0
    %1671 = vmatpush1.msra.mxu0 0.0
    %1672 = vmatprep.subr.mxu0 0.0
    %1673 = vmatpush1.msra.mxu0 0.0
    %1674 = vmatprep.subr.mxu0 0.0
    %1675 = vmatpush1.msra.mxu0 0.0
    %1676 = vmatprep.subr.mxu0 0.0
    %1677 = vmatpush1.msra.mxu0 0.0
    %1678 = vmatprep.subr.mxu0 0.0
    %1679 = vmatpush1.msra.mxu0 0.0
    %1680 = vmatprep.mubr.f32.mxu0 0.0
    %1681 = vmatmul.mubr.f32.gmra.mrb[0].mxu0 %v1489
    %v1682 = vpop.f32.mrb[0].mxu0
    %v1683 = vadd.f32 %v1613, %v1682
    %v1684 = vpop.f32.mrb[0].mxu0
    %1685 = vdwg.mxu0
    %v1686 = vmax.f32 %v1683, 0.0
    %v1687 = vld [vmem:[%s6] sm:$0xff]
    %v1688 = vld [vmem:[%s6 + $0x8] sm:$0xff]
    %v1689 = vld [vmem:[%s6 + $0x10] sm:$0xff]
    %v1690 = vld [vmem:[%s6 + $0x18] sm:$0xff]
    %v1691 = vld [vmem:[%s6 + $0x20] sm:$0xff]
    %v1692 = vld [vmem:[%s6 + $0x28] sm:$0xff]
    %v1693 = vld [vmem:[%s6 + $0x30] sm:$0xff]
    %v1694 = vld [vmem:[%s6 + $0x38] sm:$0xff]
    %v1695 = vld [vmem:[%s6 + $0x40] sm:$0xff]
    %v1696 = vld [vmem:[%s6 + $0x48] sm:$0xff]
    %v1697 = vld [vmem:[%s6 + $0x50] sm:$0xff]
    %v1698 = vld [vmem:[%s6 + $0x58] sm:$0xff]
    %v1699 = vld [vmem:[%s6 + $0x60] sm:$0xff]
    %v1700 = vld [vmem:[%s6 + $0x68] sm:$0xff]
    %v1701 = vld [vmem:[%s6 + $0x70] sm:$0xff]
    %v1702 = vld [vmem:[%s6 + $0x78] sm:$0xff]
    %v1703 = vld [vmem:[%s7] sm:$0x1]
    %v1705 = vlaneseq
    %v1706 = vshrl.u32 %v1705, 7
    %v1707 = vsub.s32 0, %v1706
    %v1708 = vrot.slane %v1703, %v1707
    %1710 = vmatprep.subr.mxu0 0.0
    %1711 = vmatpush1.msra.mxu0 %v1687
    %1712 = vmatprep.subr.mxu0 0.0
    %1713 = vmatpush1.msra.mxu0 %v1688
    %1714 = vmatprep.subr.mxu0 0.0
    %1715 = vmatpush1.msra.mxu0 %v1689
    %1716 = vmatprep.subr.mxu0 0.0
    %1717 = vmatpush1.msra.mxu0 %v1690
    %1718 = vmatprep.subr.mxu0 0.0
    %1719 = vmatpush1.msra.mxu0 %v1691
    %1720 = vmatprep.subr.mxu0 0.0
    %1721 = vmatpush1.msra.mxu0 %v1692
    %1722 = vmatprep.subr.mxu0 0.0
    %1723 = vmatpush1.msra.mxu0 %v1693
    %1724 = vmatprep.subr.mxu0 0.0
    %1725 = vmatpush1.msra.mxu0 %v1694
    %1726 = vmatprep.subr.mxu0 0.0
    %1727 = vmatpush1.msra.mxu0 %v1695
    %1728 = vmatprep.subr.mxu0 0.0
    %1729 = vmatpush1.msra.mxu0 %v1696
    %1730 = vmatprep.subr.mxu0 0.0
    %1731 = vmatpush1.msra.mxu0 %v1697
    %1732 = vmatprep.subr.mxu0 0.0
    %1733 = vmatpush1.msra.mxu0 %v1698
    %1734 = vmatprep.subr.mxu0 0.0
    %1735 = vmatpush1.msra.mxu0 %v1699
    %1736 = vmatprep.subr.mxu0 0.0
    %1737 = vmatpush1.msra.mxu0 %v1700
    %1738 = vmatprep.subr.mxu0 0.0
    %1739 = vmatpush1.msra.mxu0 %v1701
    %1740 = vmatprep.subr.mxu0 0.0
    %1741 = vmatpush1.msra.mxu0 %v1702
    %1742 = vmatprep.subr.mxu0 0.0
    %1743 = vmatpush1.msra.mxu0 0.0
    %1744 = vmatprep.subr.mxu0 0.0
    %1745 = vmatpush1.msra.mxu0 0.0
    %1746 = vmatprep.subr.mxu0 0.0
    %1747 = vmatpush1.msra.mxu0 0.0
    %1748 = vmatprep.subr.mxu0 0.0
    %1749 = vmatpush1.msra.mxu0 0.0
    %1750 = vmatprep.subr.mxu0 0.0
    %1751 = vmatpush1.msra.mxu0 0.0
    %1752 = vmatprep.subr.mxu0 0.0
    %1753 = vmatpush1.msra.mxu0 0.0
    %1754 = vmatprep.subr.mxu0 0.0
    %1755 = vmatpush1.msra.mxu0 0.0
    %1756 = vmatprep.subr.mxu0 0.0
    %1757 = vmatpush1.msra.mxu0 0.0
    %1758 = vmatprep.subr.mxu0 0.0
    %1759 = vmatpush1.msra.mxu0 0.0
    %1760 = vmatprep.subr.mxu0 0.0
    %1761 = vmatpush1.msra.mxu0 0.0
    %1762 = vmatprep.subr.mxu0 0.0
    %1763 = vmatpush1.msra.mxu0 0.0
    %1764 = vmatprep.subr.mxu0 0.0
    %1765 = vmatpush1.msra.mxu0 0.0
    %1766 = vmatprep.subr.mxu0 0.0
    %1767 = vmatpush1.msra.mxu0 0.0
    %1768 = vmatprep.subr.mxu0 0.0
    %1769 = vmatpush1.msra.mxu0 0.0
    %1770 = vmatprep.subr.mxu0 0.0
    %1771 = vmatpush1.msra.mxu0 0.0
    %1772 = vmatprep.subr.mxu0 0.0
    %1773 = vmatpush1.msra.mxu0 0.0
    %1774 = vmatprep.mubr.f32.mxu0 0.0
    %1775 = vmatmul.mubr.f32.gmra.mrb[0].mxu0 %v1686
    %v1776 = vpop.f32.mrb[0].mxu0
    %v1777 = vadd.f32 %v1708, %v1776
    %v1778 = vpop.f32.mrb[0].mxu0
    %1779 = vdwg.mxu0
    %1780 = vst [vmem:[#allocation7] sm:$0xff] %v1777
    // Predicated region
    $region42: #{tpu_custom_call.1} parent=1 // pred_check
      _
    $region43: #{tpu_custom_call.1} parent=1 // pred_check_branch
      %1782 = sbr.rel (0) target = $region45
    $region44: #{tpu_custom_call.1} parent=1 // pred_region
      %s1784 = ssub.s32 128, 128
      %1785 = vsyncadd [#allocation4], %s1784
      %s1787 = sshll.u32 [#allocation7], 4
      %s1788 = int_to_ptr.vmem [resolvable:$true] %s1787
      %1790 = dma.vmem_to_hbm [thread:$0]  %s1788, 128, %s8, [#allocation4]
    $region45: #{tpu_custom_call.1} parent=1 // pred_fallthru
      _
    // Predicated region
    $region46: #{tpu_custom_call.1} parent=1 // pred_check
      _
    $region47: #{tpu_custom_call.1} parent=1 // pred_check_branch
      %1792 = sbr.rel (0) target = $region49
    $region48: #{tpu_custom_call.1} parent=1 // pred_region
      %1793 = dma.done [#allocation4], 128
    $region49: #{tpu_custom_call.1} parent=1 // pred_fallthru
      _
    %1794 = vsyncpa [#allocation3], 1
    %1795 = vsyncpa [#allocation6], 1
    %1796 = vsyncpa [#allocation4], 1

</llo_original>
